<compile_context>
chip_gen: v7x
topology: tpu7x:2x2x1
jax: 0.10.0
libtpu: 0.0.40
codegen_flags: <defaults>
</compile_context>

<pallas_src>
import functools

import jax
import jax.numpy as jnp
from jax import lax
from jax.experimental import pallas as pl
from jax.experimental.pallas import tpu as pltpu

LN_EPS = 1e-5
MIX_RATIO = 0.5
_LANE = 128


def _round_up(x, m):
    return ((x + m - 1) // m) * m


def _layer_norm_f32(x32, gamma32, beta32, d_true):
    # One-pass statistics: var = E[x^2] - mean^2 (one cross-lane reduction
    # pair).  Sums divide by the *true* feature dim so zero-padded lanes do
    # not perturb the statistics; padded lanes come out exactly 0 because
    # gamma/beta are zero-padded.  NOTE: one-pass variance can lose precision
    # if |mean| >> std of the features.
    inv_d = 1.0 / float(d_true)
    s1 = jnp.sum(x32, axis=-1, keepdims=True)
    s2 = jnp.sum(x32 * x32, axis=-1, keepdims=True)
    mu = s1 * inv_d
    var = s2 * inv_d - mu * mu
    return (x32 - mu) * lax.rsqrt(var + LN_EPS) * gamma32 + beta32


def _cross_attention_kernel(img_ref, txt_ref, gamma_ref, beta_ref,
                            img_out_ref, txt_out_ref,
                            txt_n_ref, txt_acc_ref,
                            *, scale, inv_scale, d_true, nt_true, nt_is_padded):
    q_idx = pl.program_id(1)
    n_q = pl.num_programs(1)

    cdt = img_ref.dtype                 # matmul operand dtype (input dtype)
    gamma = gamma_ref[...]              # (1, Dp) f32 (cast once in wrapper)
    beta = beta_ref[...]                # (1, Dp) f32

    # --- first Ni tile of this batch element: LayerNorm the (resident) text
    #     block once into scratch, zero the text_attended accumulator.
    @pl.when(q_idx == 0)
    def _init():
        txt32 = txt_ref[0].astype(jnp.float32)                      # (Ntp, Dp)
        txt_n_ref[...] = _layer_norm_f32(txt32, gamma, beta, d_true).astype(cdt)
        txt_acc_ref[...] = jnp.zeros_like(txt_acc_ref)

    # --- every tile: LayerNorm this image tile, attend against full text.
    img32 = img_ref[0].astype(jnp.float32)                          # (tq, Dp)
    img_n32 = _layer_norm_f32(img32, gamma, beta, d_true)
    # Single cast of the image tile: softmax scale folded into Q here and
    # removed from the text accumulator once at finalize.
    img_q = (img_n32 * scale).astype(cdt)
    txt_c = txt_n_ref[...]                                          # (Ntp, Dp)

    # logits = (img_n * scale) @ txt_n^T   (contract last dims, no explicit .T)
    logits = lax.dot_general(img_q, txt_c, (((1,), (1,)), ((), ())),
                             preferred_element_type=jnp.float32)
    if nt_is_padded:
        key_mask = lax.broadcasted_iota(jnp.int32, logits.shape, 1) < nt_true
        logits = jnp.where(key_mask, logits, -1e30)

    logits = logits - jnp.max(logits, axis=-1, keepdims=True)
    p = jnp.exp(logits)
    denom = jnp.sum(p, axis=-1, keepdims=True)
    attn32 = p * pl.reciprocal(denom, approx=True)                  # EUP vrcp
    attn_c = attn32.astype(cdt)

    # image_attended = attn @ txt_n  -> (tq, Dp), write this tile's output.
    img_att = jnp.dot(attn_c, txt_c, preferred_element_type=jnp.float32)
    img_out_ref[0] = ((1.0 - MIX_RATIO) * img_n32
                      + MIX_RATIO * img_att).astype(img_out_ref.dtype)

    # text_attended partial = attn^T @ (scale * img_n) -> (Ntp, Dp); accumulate
    # across Ni tiles (contract dim 0 of both: transposed-LHS MXU form, no
    # explicit vxpose of the attn tile).
    txt_acc_ref[...] += lax.dot_general(attn_c, img_q, (((0,), (0,)), ((), ())),
                                        preferred_element_type=jnp.float32)

    # --- last Ni tile: un-fold the scale, mix + store the text output.
    @pl.when(q_idx == n_q - 1)
    def _finalize():
        txt_n32 = txt_n_ref[...].astype(jnp.float32)
        txt_att = txt_acc_ref[...] * inv_scale
        txt_out_ref[0] = ((1.0 - MIX_RATIO) * txt_n32
                          + MIX_RATIO * txt_att).astype(txt_out_ref.dtype)


def _pick_q_tile(n_i, itemsize, budget, tile_bytes):
    """Largest image-row tile that (a) respects the dtype's sublane-packing
    minimum, (b) divides Ni, and (c) fits the VMEM budget."""
    if itemsize >= 4:
        min_sub = 8
    elif itemsize == 2:
        min_sub = 16
    else:
        min_sub = 32
    for cand in (512, 256, 128, 64, 32, 16, 8):
        if cand < min_sub:
            break
        if cand <= n_i and n_i % cand == 0 and tile_bytes(cand) <= budget:
            return cand
    return n_i  # full extent is always a legal block


def cross_attention(image_features, text_features, gamma, beta):
    """image_features: (B, Ni, D), text_features: (B, Nt, D),
    gamma/beta: (D,) LayerNorm affine params (shared between both inputs)."""
    B, Ni, D = image_features.shape
    Bt, Nt, Dt = text_features.shape
    assert B == Bt and D == Dt
    assert image_features.dtype == text_features.dtype
    dtype = image_features.dtype
    itemsize = jnp.dtype(dtype).itemsize
    scale = float(D) ** (-0.5)

    # ---- lane-dense padding: feature dim and key (text-row) dim to 128. ----
    Dp = _round_up(D, _LANE)
    Ntp = _round_up(Nt, _LANE)
    if Dp != D:
        pad3 = [(0, 0), (0, 0), (0, Dp - D)]
        image_features = jnp.pad(image_features, pad3)
        text_features = jnp.pad(text_features, pad3)
        gamma = jnp.pad(gamma, (0, Dp - D))
        beta = jnp.pad(beta, (0, Dp - D))
    if Ntp != Nt:
        text_features = jnp.pad(text_features, [(0, 0), (0, Ntp - Nt), (0, 0)])
    gamma2 = gamma.astype(jnp.float32).reshape(1, Dp)
    beta2 = beta.astype(jnp.float32).reshape(1, Dp)

    # ---- generation-aware VMEM budget (64 MiB v7x vs 128 MiB v5e/v6e). ----
    try:
        vmem_capacity = int(pltpu.get_tpu_info().vmem_capacity_bytes)
    except Exception:
        vmem_capacity = 64 * 1024 * 1024  # conservative (v7x-sized) fallback
    vmem_cap = (3 * vmem_capacity) // 4   # ~48 MiB on v7x, ~96 MiB on v5e/v6e

    def text_bytes(nbuf):
        # txt-in + txt-out pipeline buffers, txt_n scratch, f32 accumulator.
        return Ntp * Dp * (2 * nbuf * itemsize + itemsize + 4)

    txt_bufs = 2
    if text_bytes(2) > vmem_cap // 2:
        # VMEM-tight (typically v7x): drop text double-buffering -- its block
        # index only changes with the batch axis, so buffer depth 1 suffices.
        txt_bufs = 1
    # TODO(synk): flash-style Nt tiling (online softmax over a third grid axis)
    # as a fallback when even single-buffered text residency exceeds VMEM.

    def tile_bytes(tq):
        return (4 * tq * Dp * itemsize        # img in + img out (double-buffered)
                + 3 * tq * Ntp * 4            # logits / p / attn (f32)
                + 3 * tq * Dp * 4)            # f32 LN / attended temps

    tq = _pick_q_tile(
        Ni, itemsize,
        budget=max(0, int(0.85 * vmem_cap) - text_bytes(txt_bufs)),
        tile_bytes=tile_bytes)
    n_q = Ni // tq

    est = text_bytes(txt_bufs) + tile_bytes(tq) + 4 * 2 * Dp * 4
    vmem_limit = int(min(vmem_cap, max(32 * 1024 * 1024, 2 * est)))

    kernel = functools.partial(
        _cross_attention_kernel,
        scale=scale, inv_scale=1.0 / scale, d_true=D,
        nt_true=Nt, nt_is_padded=(Ntp != Nt))

    txt_idx = lambda b, q: (b, 0, 0)
    if txt_bufs == 1:
        txt_in_spec = pl.BlockSpec((1, Ntp, Dp), txt_idx,
                                   pipeline_mode=pl.Buffered(1))
        txt_out_spec = pl.BlockSpec((1, Ntp, Dp), txt_idx,
                                    pipeline_mode=pl.Buffered(1))
    else:
        txt_in_spec = pl.BlockSpec((1, Ntp, Dp), txt_idx)
        txt_out_spec = pl.BlockSpec((1, Ntp, Dp), txt_idx)

    # TODO(synk): when B == 1 (or B is odd) on v7x, split the Ni axis across the
    # two TensorCores with per-core partial text accumulators for load balance.
    grid_spec = pltpu.PrefetchScalarGridSpec(
        num_scalar_prefetch=0,
        grid=(B, n_q),
        in_specs=[
            pl.BlockSpec((1, tq, Dp), lambda b, q: (b, q, 0)),
            txt_in_spec,
            pl.BlockSpec((1, Dp), lambda b, q: (0, 0)),
            pl.BlockSpec((1, Dp), lambda b, q: (0, 0)),
        ],
        out_specs=[
            pl.BlockSpec((1, tq, Dp), lambda b, q: (b, q, 0)),
            txt_out_spec,
        ],
        scratch_shapes=[
            pltpu.VMEM((Ntp, Dp), dtype),        # text_norm (resident per batch)
            pltpu.VMEM((Ntp, Dp), jnp.float32),  # text_attended accumulator
        ],
    )

    img_out, txt_out = pl.pallas_call(
        kernel,
        out_shape=(
            jax.ShapeDtypeStruct((B, Ni, Dp), dtype),
            jax.ShapeDtypeStruct((B, Ntp, Dp), dtype),
        ),
        grid_spec=grid_spec,
        compiler_params=pltpu.CompilerParams(
            dimension_semantics=("parallel", "arbitrary"),
            vmem_limit_bytes=vmem_limit),
    )(image_features, text_features, gamma2, beta2)

    if Dp != D or Ntp != Nt:
        img_out = img_out[:, :, :D]
        txt_out = txt_out[:, :Nt, :D]
    return img_out, txt_out


def _reference(image_features, text_features, gamma, beta):
    def ln(x):
        mu = jnp.mean(x, axis=-1, keepdims=True)
        var = jnp.mean((x - mu) ** 2, axis=-1, keepdims=True)
        return (x - mu) / jnp.sqrt(var + LN_EPS) * gamma + beta

    D = image_features.shape[-1]
    scale = D ** (-0.5)
    img_n = ln(image_features)
    txt_n = ln(text_features)
    attn = jnp.einsum("bid,btd->bit", img_n, txt_n) * scale
    attn = jax.nn.softmax(attn, axis=-1)
    img_att = jnp.einsum("bit,btd->bid", attn, txt_n)
    txt_att = jnp.einsum("bit,bid->btd", attn, img_n)
    img_out = img_n * (1 - MIX_RATIO) + img_att * MIX_RATIO
    txt_out = txt_n * (1 - MIX_RATIO) + txt_att * MIX_RATIO
    return img_out, txt_out


def _check(key, B, Ni, Nt, D, atol, rtol):
    k_img, k_txt, k_g, k_b = jax.random.split(key, 4)
    image_features = jax.random.normal(k_img, (B, Ni, D), dtype=jnp.float32)
    text_features = jax.random.normal(k_txt, (B, Nt, D), dtype=jnp.float32)
    gamma = 1.0 + 0.1 * jax.random.normal(k_g, (D,), dtype=jnp.float32)
    beta = 0.1 * jax.random.normal(k_b, (D,), dtype=jnp.float32)

    img_out, txt_out = cross_attention(image_features, text_features, gamma, beta)
    jax.block_until_ready((img_out, txt_out))

    ref_img, ref_txt = _reference(image_features, text_features, gamma, beta)
    assert jnp.allclose(img_out, ref_img, atol=atol, rtol=rtol)
    assert jnp.allclose(txt_out, ref_txt, atol=atol, rtol=rtol)


if __name__ == "__main__":
    key = jax.random.PRNGKey(0)
    k1, k2 = jax.random.split(key, 2)

    # Small shapes consistent with the module (single Ni tile; D=32->128 and
    # Nt=8->128 padding paths exercised, padded keys masked in-kernel).
    _check(k1, B=2, Ni=16, Nt=8, D=32, atol=3e-3, rtol=3e-3)
    # Larger check exercising the Ni-tiled accumulator path (tq=128, 3 tiles)
    # plus non-128-multiple D (96->128) and Nt (48->128) padding.
    _check(k2, B=2, Ni=384, Nt=48, D=96, atol=3e-3, rtol=3e-3)

    print("KERNEL_OK")
</pallas_src>

<mosaic_0001>
module attributes {stable_mosaic.version = 11 : i64} {
  func.func @_cross_attention_kernel(%arg0: i32, %arg1: i32, %arg2: memref<1x16x128xf32, #tpu.memory_space<vmem>>, %arg3: memref<1x128x128xf32, #tpu.memory_space<vmem>>, %arg4: memref<1x128xf32, #tpu.memory_space<vmem>>, %arg5: memref<1x128xf32, #tpu.memory_space<vmem>>, %arg6: memref<1x16x128xf32, #tpu.memory_space<vmem>>, %arg7: memref<1x128x128xf32, #tpu.memory_space<vmem>>, %arg8: memref<128x128xf32, #tpu.memory_space<vmem>>, %arg9: memref<128x128xf32, #tpu.memory_space<vmem>>) attributes {dimension_semantics = [#tpu.dimension_semantics<parallel>, #tpu.dimension_semantics<arbitrary>], iteration_bounds = array<i64: 2, 1>, scalar_prefetch = 0 : i64, scratch_operands = 2 : i64, tpu.core_type = #tpu.core_type<tc>, window_params = [{transform_indices = @transform_0, window_bounds = array<i64: 1, 16, 128>}, {transform_indices = @transform_1, window_bounds = array<i64: 1, 128, 128>}, {pipeline_mode = #tpu.pipeline_mode<synchronous>, transform_indices = @transform_2, window_bounds = array<i64: 1, 128>}, {pipeline_mode = #tpu.pipeline_mode<synchronous>, transform_indices = @transform_3, window_bounds = array<i64: 1, 128>}, {transform_indices = @transform_4, window_bounds = array<i64: 1, 16, 128>}, {transform_indices = @transform_5, window_bounds = array<i64: 1, 128, 128>}]} {
    %c0 = arith.constant 0 : index
    %c0_0 = arith.constant 0 : index
    %0 = vector.load %arg4[%c0, %c0_0] : memref<1x128xf32, #tpu.memory_space<vmem>>, vector<1x128xf32>
    %c0_1 = arith.constant 0 : index
    %c0_2 = arith.constant 0 : index
    %1 = vector.load %arg5[%c0_1, %c0_2] : memref<1x128xf32, #tpu.memory_space<vmem>>, vector<1x128xf32>
    %c0_i32 = arith.constant 0 : i32
    %2 = arith.cmpi eq, %arg1, %c0_i32 : i32
    %3 = arith.extui %2 : i1 to i32
    %c0_i32_3 = arith.constant 0 : i32
    %4 = arith.cmpi ne, %3, %c0_i32_3 : i32
    scf.if %4 {
      %c0_31 = arith.constant 0 : index
      %c0_32 = arith.constant 0 : index
      %c0_33 = arith.constant 0 : index
      %64 = vector.load %arg3[%c0_31, %c0_32, %c0_33] : memref<1x128x128xf32, #tpu.memory_space<vmem>>, vector<1x128x128xf32>
      %65 = vector.shape_cast %64 : vector<1x128x128xf32> to vector<128x128xf32>
      %cst_34 = arith.constant dense<0.000000e+00> : vector<128xf32>
      %66 = vector.multi_reduction <add>, %65, %cst_34 [1] : vector<128x128xf32> to vector<128xf32>
      %67 = vector.shape_cast %66 : vector<128xf32> to vector<128x1xf32>
      %68 = arith.mulf %65, %65 : vector<128x128xf32>
      %cst_35 = arith.constant dense<0.000000e+00> : vector<128xf32>
      %69 = vector.multi_reduction <add>, %68, %cst_35 [1] : vector<128x128xf32> to vector<128xf32>
      %70 = vector.shape_cast %69 : vector<128xf32> to vector<128x1xf32>
      %cst_36 = arith.constant 3.125000e-02 : f32
      %71 = vector.broadcast %cst_36 : f32 to vector<128x1xf32>
      %72 = arith.mulf %67, %71 : vector<128x1xf32>
      %cst_37 = arith.constant 3.125000e-02 : f32
      %73 = vector.broadcast %cst_37 : f32 to vector<128x1xf32>
      %74 = arith.mulf %70, %73 : vector<128x1xf32>
      %75 = arith.mulf %72, %72 : vector<128x1xf32>
      %76 = arith.subf %74, %75 : vector<128x1xf32>
      %77 = vector.broadcast %72 : vector<128x1xf32> to vector<128x128xf32>
      %78 = arith.subf %65, %77 : vector<128x128xf32>
      %cst_38 = arith.constant 9.99999974E-6 : f32
      %79 = vector.broadcast %cst_38 : f32 to vector<128x1xf32>
      %80 = arith.addf %76, %79 : vector<128x1xf32>
      %81 = math.rsqrt %80 : vector<128x1xf32>
      %82 = vector.broadcast %81 : vector<128x1xf32> to vector<128x128xf32>
      %83 = arith.mulf %78, %82 : vector<128x128xf32>
      %84 = vector.broadcast %0 : vector<1x128xf32> to vector<128x128xf32>
      %85 = arith.mulf %83, %84 : vector<128x128xf32>
      %86 = vector.broadcast %1 : vector<1x128xf32> to vector<128x128xf32>
      %87 = arith.addf %85, %86 : vector<128x128xf32>
      %c0_39 = arith.constant 0 : index
      %c0_40 = arith.constant 0 : index
      %88 = vector.load %arg8[%c0_39, %c0_40] : memref<128x128xf32, #tpu.memory_space<vmem>>, vector<128x128xf32>
      tpu.vector_store %arg8[%c0_39, %c0_40], %87 {strides = array<i32>} : memref<128x128xf32, #tpu.memory_space<vmem>>, vector<128x128xf32>,
      %cst_41 = arith.constant 0.000000e+00 : f32
      %89 = vector.broadcast %cst_41 : f32 to vector<128x128xf32>
      %c0_42 = arith.constant 0 : index
      %c0_43 = arith.constant 0 : index
      %90 = vector.load %arg9[%c0_42, %c0_43] : memref<128x128xf32, #tpu.memory_space<vmem>>, vector<128x128xf32>
      tpu.vector_store %arg9[%c0_42, %c0_43], %89 {strides = array<i32>} : memref<128x128xf32, #tpu.memory_space<vmem>>, vector<128x128xf32>,
    } else {
    }
    %c0_4 = arith.constant 0 : index
    %c0_5 = arith.constant 0 : index
    %c0_6 = arith.constant 0 : index
    %5 = vector.load %arg2[%c0_4, %c0_5, %c0_6] : memref<1x16x128xf32, #tpu.memory_space<vmem>>, vector<1x16x128xf32>
    %6 = vector.shape_cast %5 : vector<1x16x128xf32> to vector<16x128xf32>
    %cst = arith.constant dense<0.000000e+00> : vector<16xf32>
    %7 = vector.multi_reduction <add>, %6, %cst [1] : vector<16x128xf32> to vector<16xf32>
    %8 = vector.shape_cast %7 : vector<16xf32> to vector<16x1xf32>
    %9 = arith.mulf %6, %6 : vector<16x128xf32>
    %cst_7 = arith.constant dense<0.000000e+00> : vector<16xf32>
    %10 = vector.multi_reduction <add>, %9, %cst_7 [1] : vector<16x128xf32> to vector<16xf32>
    %11 = vector.shape_cast %10 : vector<16xf32> to vector<16x1xf32>
    %cst_8 = arith.constant 3.125000e-02 : f32
    %12 = vector.broadcast %cst_8 : f32 to vector<16x1xf32>
    %13 = arith.mulf %8, %12 : vector<16x1xf32>
    %cst_9 = arith.constant 3.125000e-02 : f32
    %14 = vector.broadcast %cst_9 : f32 to vector<16x1xf32>
    %15 = arith.mulf %11, %14 : vector<16x1xf32>
    %16 = arith.mulf %13, %13 : vector<16x1xf32>
    %17 = arith.subf %15, %16 : vector<16x1xf32>
    %18 = vector.broadcast %13 : vector<16x1xf32> to vector<16x128xf32>
    %19 = arith.subf %6, %18 : vector<16x128xf32>
    %cst_10 = arith.constant 9.99999974E-6 : f32
    %20 = vector.broadcast %cst_10 : f32 to vector<16x1xf32>
    %21 = arith.addf %17, %20 : vector<16x1xf32>
    %22 = math.rsqrt %21 : vector<16x1xf32>
    %23 = vector.broadcast %22 : vector<16x1xf32> to vector<16x128xf32>
    %24 = arith.mulf %19, %23 : vector<16x128xf32>
    %25 = vector.broadcast %0 : vector<1x128xf32> to vector<16x128xf32>
    %26 = arith.mulf %24, %25 : vector<16x128xf32>
    %27 = vector.broadcast %1 : vector<1x128xf32> to vector<16x128xf32>
    %28 = arith.addf %26, %27 : vector<16x128xf32>
    %cst_11 = arith.constant 0.176776692 : f32
    %29 = vector.broadcast %cst_11 : f32 to vector<16x128xf32>
    %30 = arith.mulf %28, %29 : vector<16x128xf32>
    %c0_12 = arith.constant 0 : index
    %c0_13 = arith.constant 0 : index
    %31 = vector.load %arg8[%c0_12, %c0_13] : memref<128x128xf32, #tpu.memory_space<vmem>>, vector<128x128xf32>
    %cst_14 = arith.constant dense<0.000000e+00> : vector<16x128xf32>
    %32 = tpu.matmul %30, %31, %cst_14 {dimension_numbers = #tpu.dot_dimension_numbers<[1], [1], [0], [0], [0, 0, 1, 0], [], []>} : vector<16x128xf32>, vector<128x128xf32>, vector<16x128xf32> -> vector<16x128xf32>
    %33 = tpu.iota {dimensions = array<i32: 1>} : vector<16x128xi32>
    %c8_i32 = arith.constant 8 : i32
    %34 = vector.broadcast %c8_i32 : i32 to vector<16x128xi32>
    %35 = arith.cmpi slt, %33, %34 : vector<16x128xi32>
    %cst_15 = arith.constant -1.000000e+30 : f32
    %36 = vector.broadcast %cst_15 : f32 to vector<16x128xf32>
    %37 = arith.select %35, %32, %36 : vector<16x128xi1>, vector<16x128xf32>
    %cst_16 = arith.constant dense<0xFF800000> : vector<16xf32>
    %38 = vector.multi_reduction <maximumf>, %37, %cst_16 [1] : vector<16x128xf32> to vector<16xf32>
    %39 = vector.shape_cast %38 : vector<16xf32> to vector<16x1xf32>
    %40 = vector.broadcast %39 : vector<16x1xf32> to vector<16x128xf32>
    %41 = arith.subf %37, %40 : vector<16x128xf32>
    %42 = math.exp %41 : vector<16x128xf32>
    %cst_17 = arith.constant dense<0.000000e+00> : vector<16xf32>
    %43 = vector.multi_reduction <add>, %42, %cst_17 [1] : vector<16x128xf32> to vector<16xf32>
    %44 = vector.shape_cast %43 : vector<16xf32> to vector<16x1xf32>
    %45 = tpu.reciprocal %44 {approx = true} : vector<16x1xf32> -> vector<16x1xf32>
    %46 = vector.broadcast %45 : vector<16x1xf32> to vector<16x128xf32>
    %47 = arith.mulf %42, %46 : vector<16x128xf32>
    %cst_18 = arith.constant dense<0.000000e+00> : vector<16x128xf32>
    %48 = tpu.matmul %47, %31, %cst_18 {dimension_numbers = #tpu.dot_dimension_numbers<[1], [0], [0], [1], [0, 0, 1, 1], [], []>} : vector<16x128xf32>, vector<128x128xf32>, vector<16x128xf32> -> vector<16x128xf32>
    %cst_19 = arith.constant 5.000000e-01 : f32
    %49 = vector.broadcast %cst_19 : f32 to vector<16x128xf32>
    %50 = arith.mulf %49, %28 : vector<16x128xf32>
    %cst_20 = arith.constant 5.000000e-01 : f32
    %51 = vector.broadcast %cst_20 : f32 to vector<16x128xf32>
    %52 = arith.mulf %51, %48 : vector<16x128xf32>
    %53 = arith.addf %50, %52 : vector<16x128xf32>
    %c0_21 = arith.constant 0 : index
    %c0_22 = arith.constant 0 : index
    %c0_23 = arith.constant 0 : index
    %54 = vector.load %arg6[%c0_21, %c0_22, %c0_23] : memref<1x16x128xf32, #tpu.memory_space<vmem>>, vector<1x16x128xf32>
    %55 = vector.shape_cast %54 : vector<1x16x128xf32> to vector<16x128xf32>
    %56 = vector.shape_cast %53 : vector<16x128xf32> to vector<1x16x128xf32>
    tpu.vector_store %arg6[%c0_21, %c0_22, %c0_23], %56 {strides = array<i32>} : memref<1x16x128xf32, #tpu.memory_space<vmem>>, vector<1x16x128xf32>,
    %c0_24 = arith.constant 0 : index
    %c0_25 = arith.constant 0 : index
    %57 = vector.load %arg9[%c0_24, %c0_25] : memref<128x128xf32, #tpu.memory_space<vmem>>, vector<128x128xf32>
    %cst_26 = arith.constant dense<0.000000e+00> : vector<128x128xf32>
    %58 = tpu.matmul %47, %30, %cst_26 {dimension_numbers = #tpu.dot_dimension_numbers<[0], [0], [1], [1], [0, 1, 1, 1], [], []>} : vector<16x128xf32>, vector<16x128xf32>, vector<128x128xf32> -> vector<128x128xf32>
    %59 = arith.addf %57, %58 : vector<128x128xf32>
    %c0_27 = arith.constant 0 : index
    %c0_28 = arith.constant 0 : index
    %60 = vector.load %arg9[%c0_27, %c0_28] : memref<128x128xf32, #tpu.memory_space<vmem>>, vector<128x128xf32>
    tpu.vector_store %arg9[%c0_27, %c0_28], %59 {strides = array<i32>} : memref<128x128xf32, #tpu.memory_space<vmem>>, vector<128x128xf32>,
    %c0_i32_29 = arith.constant 0 : i32
    %61 = arith.cmpi eq, %arg1, %c0_i32_29 : i32
    %62 = arith.extui %61 : i1 to i32
    %c0_i32_30 = arith.constant 0 : i32
    %63 = arith.cmpi ne, %62, %c0_i32_30 : i32
    scf.if %63 {
      %c0_31 = arith.constant 0 : index
      %c0_32 = arith.constant 0 : index
      %64 = vector.load %arg8[%c0_31, %c0_32] : memref<128x128xf32, #tpu.memory_space<vmem>>, vector<128x128xf32>
      %c0_33 = arith.constant 0 : index
      %c0_34 = arith.constant 0 : index
      %65 = vector.load %arg9[%c0_33, %c0_34] : memref<128x128xf32, #tpu.memory_space<vmem>>, vector<128x128xf32>
      %cst_35 = arith.constant 5.65685415 : f32
      %66 = vector.broadcast %cst_35 : f32 to vector<128x128xf32>
      %67 = arith.mulf %65, %66 : vector<128x128xf32>
      %cst_36 = arith.constant 5.000000e-01 : f32
      %68 = vector.broadcast %cst_36 : f32 to vector<128x128xf32>
      %69 = arith.mulf %68, %64 : vector<128x128xf32>
      %cst_37 = arith.constant 5.000000e-01 : f32
      %70 = vector.broadcast %cst_37 : f32 to vector<128x128xf32>
      %71 = arith.mulf %70, %67 : vector<128x128xf32>
      %72 = arith.addf %69, %71 : vector<128x128xf32>
      %c0_38 = arith.constant 0 : index
      %c0_39 = arith.constant 0 : index
      %c0_40 = arith.constant 0 : index
      %73 = vector.load %arg7[%c0_38, %c0_39, %c0_40] : memref<1x128x128xf32, #tpu.memory_space<vmem>>, vector<1x128x128xf32>
      %74 = vector.shape_cast %73 : vector<1x128x128xf32> to vector<128x128xf32>
      %75 = vector.shape_cast %72 : vector<128x128xf32> to vector<1x128x128xf32>
      tpu.vector_store %arg7[%c0_38, %c0_39, %c0_40], %75 {strides = array<i32>} : memref<1x128x128xf32, #tpu.memory_space<vmem>>, vector<1x128x128xf32>,
    } else {
    }
    return
  }
  func.func @transform_0(%arg0: i32, %arg1: i32) -> (i32, i32, i32) {
    %c0_i32 = arith.constant 0 : i32
    %c0_i32_0 = arith.constant 0 : i32
    return %arg0, %arg1, %c0_i32 : i32, i32, i32
  }
  func.func @transform_1(%arg0: i32, %arg1: i32) -> (i32, i32, i32) {
    %c0_i32 = arith.constant 0 : i32
    %c0_i32_0 = arith.constant 0 : i32
    %c0_i32_1 = arith.constant 0 : i32
    return %arg0, %c0_i32, %c0_i32_0 : i32, i32, i32
  }
  func.func @transform_2(%arg0: i32, %arg1: i32) -> (i32, i32) {
    %c0_i32 = arith.constant 0 : i32
    %c0_i32_0 = arith.constant 0 : i32
    %c0_i32_1 = arith.constant 0 : i32
    return %c0_i32, %c0_i32_0 : i32, i32
  }
  func.func @transform_3(%arg0: i32, %arg1: i32) -> (i32, i32) {
    %c0_i32 = arith.constant 0 : i32
    %c0_i32_0 = arith.constant 0 : i32
    %c0_i32_1 = arith.constant 0 : i32
    return %c0_i32, %c0_i32_0 : i32, i32
  }
  func.func @transform_4(%arg0: i32, %arg1: i32) -> (i32, i32, i32) {
    %c0_i32 = arith.constant 0 : i32
    %c0_i32_0 = arith.constant 0 : i32
    return %arg0, %arg1, %c0_i32 : i32, i32, i32
  }
  func.func @transform_5(%arg0: i32, %arg1: i32) -> (i32, i32, i32) {
    %c0_i32 = arith.constant 0 : i32
    %c0_i32_0 = arith.constant 0 : i32
    %c0_i32_1 = arith.constant 0 : i32
    return %arg0, %c0_i32, %c0_i32_0 : i32, i32, i32
  }
}

</mosaic_0001>

<llo_original>
// kernel: tpu_custom_call.1
$region0: #{tpu_custom_call.1}
  #allocation0 [shape = 'u32[]', space=smem, size = 0x4, offset = 0x4, fixed_abs, tag = 'smem constant byte address 0x4 - core index']
  #allocation1 [shape = 'u32[144,128]{1,0:T(1,128)}', space=vmem, size = 0x12000, scoped, tag = 'internal scratch']
  #allocation2 [shape = 'f32[128,128]{1,0:T(8,128)}', space=vmem, size = 0x10000, scoped, tag = 'scratch operand']
  #allocation3 [shape = 'f32[128,128]{1,0:T(8,128)}', space=vmem, size = 0x10000, scoped, tag = 'scratch operand']
  %s0 = inlined_call_operand.hbm [shape: f32[2,16,128], index: 0, kind: input, shape index: {}]
  %s1 = inlined_call_operand.hbm [shape: f32[2,128,128], index: 1, kind: input, shape index: {}]
  %s2 = inlined_call_operand.vmem [shape: f32[1,128], index: 2, kind: input, shape index: {}]
  %s3 = inlined_call_operand.vmem [shape: f32[1,128], index: 3, kind: input, shape index: {}]
  %s4 = inlined_call_operand.hbm [shape: f32[2,16,128], index: 4, kind: output, shape index: {0}]
  %s5 = inlined_call_operand.hbm [shape: f32[2,128,128], index: 5, kind: output, shape index: {1}]
  %6 = xla_tuple %s4, %s5
  %s7 = sld [smem:[#allocation0]]
  $region73: #{tpu_custom_call.1} parent=0
    _
  %s9 = ssub.s32 1, %s7
  %s10 = scalar_select 0, %s9, %s7
  $region1: #{tpu_custom_call.1} parent=0
    #allocation4 [shape = 'u8[16384]{0}', space=vmem, size = 0x4000, scoped, tag = 'input window, operand 0']
    #allocation5 [shape = 's32[2]{0}', space=sflag, size = 0x8, scoped, tag = 'scoped memory for tpu_custom_call.1']
    #allocation6 [shape = 's32[2]{0}', space=sflag, size = 0x8, scoped, tag = 'scoped memory for tpu_custom_call.1']
    #allocation7 [shape = 'u8[131072]{0}', space=vmem, size = 0x20000, scoped, tag = 'input window, operand 1']
    #allocation8 [shape = 's32[2]{0}', space=sflag, size = 0x8, scoped, tag = 'scoped memory for tpu_custom_call.1']
    #allocation9 [shape = 'u8[16384]{0}', space=vmem, size = 0x4000, scoped, tag = 'output window, operand 0']
    #allocation10 [shape = 'u8[131072]{0}', space=vmem, size = 0x20000, scoped, tag = 'output window, operand 1']
    #allocation11 [shape = 's32[2]{0}', space=sflag, size = 0x8, scoped, tag = 'scoped memory for tpu_custom_call.1']
    %11 = vsyncpa [#allocation5], 0
    %s12 = scalar_lea.sflag [#allocation5], 1
    %13 = vsyncpa %s12, 0
    %14 = vsyncpa [#allocation8], 0
    %s15 = scalar_lea.sflag [#allocation8], 1
    %16 = vsyncpa %s15, 0
    %17 = vsyncpa [#allocation6], 0
    %s18 = scalar_lea.sflag [#allocation6], 1
    %19 = vsyncpa %s18, 0
    %20 = vsyncpa [#allocation11], 0
    %s21 = scalar_lea.sflag [#allocation11], 1
    %22 = vsyncpa %s21, 0
    loop: start=0, step=1, limit=4
    $region2: #{tpu_custom_call.1} parent=1 // loop_pre_header
      _
    $region3: #{tpu_custom_call.1} parent=1 // loop_header
      %s24 = sphi 0, %s28
      %p25 = scmp.ge.s32.totalorder %s24, 4
      %s31 = sphi 0, %s43
      %s32 = sphi 0, %s39
      %s33 = sphi 0, %s31
      %s34 = sphi 0, %s32
      %s35 = sphi 0, %s33
      %s36 = sphi 0, %s34
      %s48 = sphi 0, %s50
      %s51 = sphi 0, %s48
      %s52 = sphi 0, %s51
      %s68 = sphi 0, %s52
      %s74 = sphi 0, %s76
      %s77 = sphi 0, %s74
      %s78 = sphi 0, %s77
      %s94 = sphi 0, %s78
      %s98 = sphi 0, %s98
      %s100 = sphi 0, %s98
      %s101 = sphi 0, %s100
      %s115 = sphi 0, %s101
      %s119 = sphi 0, %s119
      %s121 = sphi 0, %s119
      %s122 = sphi 0, %s121
      %s136 = sphi 0, %s122
      %s144 = sphi 0, %s146
      %s147 = sphi 0, %s144
      %s148 = sphi 0, %s147
      %s164 = sphi 0, %s148
      %s170 = sphi 0, %s172
      %s173 = sphi 0, %s170
      %s174 = sphi 0, %s173
      %s190 = sphi 0, %s174
    $region4: #{tpu_custom_call.1} parent=1 // loop_header_branch
      %27 = sbr.rel (%p25) target = $region8
    $region5: #{tpu_custom_call.1} parent=1 // loop_body
      %s29 = ssub.s32 %s24, 1
      %s30 = ssub.s32 %s24, 2
      %s37 = sadd.s32 1, %s32
      %p38 = scmp.ge.s32.totalorder %s37, 1
      %s39 = scalar_select %p38, 0, %s37
      %s40 = sadd.s32 1, %s31
      %s41 = scalar_select %p38, %s40, %s31
      %p42 = scmp.ge.s32.totalorder %s41, 2
      %s43 = scalar_select %p42, 0, %s41
      %s44 = ssub.s32 %s31, %s43
      %s45 = ssub.s32 %s32, %s39
      %s46 = sor.u32 %s44, %s45
      %p47 = scmp.eq.s32.totalorder %s46, 0
      %s49 = sadd.s32 %s48, 1
      %s50 = scalar_select %p47, %s48, %s49
      %p53 = pneg %p47
      %p54 = scmp.eq.s32.totalorder %s24, 1
      %p55 = por %p53, %p54
      %p56 = scmp.ne.s32.totalorder %s48, %s51
      %p57 = scmp.eq.s32.totalorder %s24, 0
      %p58 = por %p56, %p57
      %p59 = scmp.ne.s32.totalorder %s48, %s51
      %p60 = scmp.eq.s32.totalorder %s29, 1
      %p61 = por %p59, %p60
      %p62 = scmp.ne.s32.totalorder %s51, %s52
      %p63 = scmp.eq.s32.totalorder %s29, 0
      %p64 = por %p62, %p63
      %p65 = scmp.ne.s32.totalorder %s51, %s52
      %p66 = scmp.eq.s32.totalorder %s30, 1
      %p67 = por %p65, %p66
      %p69 = scmp.ne.s32.totalorder %s52, %s68
      %p70 = scmp.eq.s32.totalorder %s30, 0
      %p71 = por %p69, %p70
      %s72 = ssub.s32 %s31, %s43
      %p73 = scmp.eq.s32.totalorder %s72, 0
      %s75 = sadd.s32 %s74, 1
      %s76 = scalar_select %p73, %s74, %s75
      %p79 = pneg %p73
      %p80 = scmp.eq.s32.totalorder %s24, 1
      %p81 = por %p79, %p80
      %p82 = scmp.ne.s32.totalorder %s74, %s77
      %p83 = scmp.eq.s32.totalorder %s24, 0
      %p84 = por %p82, %p83
      %p85 = scmp.ne.s32.totalorder %s74, %s77
      %p86 = scmp.eq.s32.totalorder %s29, 1
      %p87 = por %p85, %p86
      %p88 = scmp.ne.s32.totalorder %s77, %s78
      %p89 = scmp.eq.s32.totalorder %s29, 0
      %p90 = por %p88, %p89
      %p91 = scmp.ne.s32.totalorder %s77, %s78
      %p92 = scmp.eq.s32.totalorder %s30, 1
      %p93 = por %p91, %p92
      %p95 = scmp.ne.s32.totalorder %s78, %s94
      %p96 = scmp.eq.s32.totalorder %s30, 0
      %p97 = por %p95, %p96
      %s99 = sadd.s32 %s98, 1
      %p102 = scmp.eq.s32.totalorder %s24, 1
      %p103 = scmp.ne.s32.totalorder %s98, %s100
      %p104 = scmp.eq.s32.totalorder %s24, 0
      %p105 = por %p103, %p104
      %p106 = scmp.ne.s32.totalorder %s98, %s100
      %p107 = scmp.eq.s32.totalorder %s29, 1
      %p108 = por %p106, %p107
      %p109 = scmp.ne.s32.totalorder %s100, %s101
      %p110 = scmp.eq.s32.totalorder %s29, 0
      %p111 = por %p109, %p110
      %p112 = scmp.ne.s32.totalorder %s100, %s101
      %p113 = scmp.eq.s32.totalorder %s30, 1
      %p114 = por %p112, %p113
      %p116 = scmp.ne.s32.totalorder %s101, %s115
      %p117 = scmp.eq.s32.totalorder %s30, 0
      %p118 = por %p116, %p117
      %s120 = sadd.s32 %s119, 1
      %p123 = scmp.eq.s32.totalorder %s24, 1
      %p124 = scmp.ne.s32.totalorder %s119, %s121
      %p125 = scmp.eq.s32.totalorder %s24, 0
      %p126 = por %p124, %p125
      %p127 = scmp.ne.s32.totalorder %s119, %s121
      %p128 = scmp.eq.s32.totalorder %s29, 1
      %p129 = por %p127, %p128
      %p130 = scmp.ne.s32.totalorder %s121, %s122
      %p131 = scmp.eq.s32.totalorder %s29, 0
      %p132 = por %p130, %p131
      %p133 = scmp.ne.s32.totalorder %s121, %s122
      %p134 = scmp.eq.s32.totalorder %s30, 1
      %p135 = por %p133, %p134
      %p137 = scmp.ne.s32.totalorder %s122, %s136
      %p138 = scmp.eq.s32.totalorder %s30, 0
      %p139 = por %p137, %p138
      %s140 = ssub.s32 %s31, %s43
      %s141 = ssub.s32 %s32, %s39
      %s142 = sor.u32 %s140, %s141
      %p143 = scmp.eq.s32.totalorder %s142, 0
      %s145 = sadd.s32 %s144, 1
      %s146 = scalar_select %p143, %s144, %s145
      %p149 = pneg %p143
      %p150 = scmp.eq.s32.totalorder %s24, 1
      %p151 = por %p149, %p150
      %p152 = scmp.ne.s32.totalorder %s144, %s147
      %p153 = scmp.eq.s32.totalorder %s24, 0
      %p154 = por %p152, %p153
      %p155 = scmp.ne.s32.totalorder %s144, %s147
      %p156 = scmp.eq.s32.totalorder %s29, 1
      %p157 = por %p155, %p156
      %p158 = scmp.ne.s32.totalorder %s147, %s148
      %p159 = scmp.eq.s32.totalorder %s29, 0
      %p160 = por %p158, %p159
      %p161 = scmp.ne.s32.totalorder %s147, %s148
      %p162 = scmp.eq.s32.totalorder %s30, 1
      %p163 = por %p161, %p162
      %p165 = scmp.ne.s32.totalorder %s148, %s164
      %p166 = scmp.eq.s32.totalorder %s30, 0
      %p167 = por %p165, %p166
      %s168 = ssub.s32 %s31, %s43
      %p169 = scmp.eq.s32.totalorder %s168, 0
      %s171 = sadd.s32 %s170, 1
      %s172 = scalar_select %p169, %s170, %s171
      %p175 = pneg %p169
      %p176 = scmp.eq.s32.totalorder %s24, 1
      %p177 = por %p175, %p176
      %p178 = scmp.ne.s32.totalorder %s170, %s173
      %p179 = scmp.eq.s32.totalorder %s24, 0
      %p180 = por %p178, %p179
      %p181 = scmp.ne.s32.totalorder %s170, %s173
      %p182 = scmp.eq.s32.totalorder %s29, 1
      %p183 = por %p181, %p182
      %p184 = scmp.ne.s32.totalorder %s173, %s174
      %p185 = scmp.eq.s32.totalorder %s29, 0
      %p186 = por %p184, %p185
      %p187 = scmp.ne.s32.totalorder %s173, %s174
      %p188 = scmp.eq.s32.totalorder %s30, 1
      %p189 = por %p187, %p188
      %p191 = scmp.ne.s32.totalorder %s174, %s190
      %p192 = scmp.eq.s32.totalorder %s30, 0
      %p193 = por %p191, %p192
      %p194 = scmp.le.s32.totalorder 1, %s24
      %p195 = scmp.lt.s32.totalorder %s24, 3
      %p196 = pnand %p194, %p195
      %p197 = pneg %p196
      // Predicated region
      $region9: #{tpu_custom_call.1} parent=5 // pred_check
        _
      $region10: #{tpu_custom_call.1} parent=5 // pred_check_branch
        %199 = sbr.rel (%p196) target = $region12
      $region11: #{tpu_custom_call.1} parent=5 // pred_region
        %s200 = ssub.s32 %s24, 1
        // Predicated region
        $region13: #{tpu_custom_call.1} parent=11 // pred_check
          %p201 = pneg %p111
        $region14: #{tpu_custom_call.1} parent=11 // pred_check_branch
          %203 = sbr.rel (%p201) target = $region16
        $region15: #{tpu_custom_call.1} parent=11 // pred_region
          _
        $region16: #{tpu_custom_call.1} parent=11 // pred_fallthru
          _
        // Predicated region
        $region17: #{tpu_custom_call.1} parent=11 // pred_check
          %p204 = pneg %p132
        $region18: #{tpu_custom_call.1} parent=11 // pred_check_branch
          %206 = sbr.rel (%p204) target = $region20
        $region19: #{tpu_custom_call.1} parent=11 // pred_region
          _
        $region20: #{tpu_custom_call.1} parent=11 // pred_fallthru
          _
      $region12: #{tpu_custom_call.1} parent=5 // pred_fallthru
        _
      %p207 = scmp.lt.s32.totalorder %s24, 2
      // Predicated region
      $region21: #{tpu_custom_call.1} parent=5 // pred_check
        %p208 = pneg %p207
      $region22: #{tpu_custom_call.1} parent=5 // pred_check_branch
        %210 = sbr.rel (%p208) target = $region24
      $region23: #{tpu_custom_call.1} parent=5 // pred_region
        // Predicated region
        $region25: #{tpu_custom_call.1} parent=23 // pred_check
          %p211 = pneg %p58
        $region26: #{tpu_custom_call.1} parent=23 // pred_check_branch
          %213 = sbr.rel (%p211) target = $region28
        $region27: #{tpu_custom_call.1} parent=23 // pred_region
          %s214 = sand.u32 %s48, 1
          %s215 = scalar_lea.sflag [#allocation5], %s214
          %s216 = sand.u32 %s48, 1
          %s217 = smul.addr %s216, 16
          %s218 = scalar_lea.vmem [#allocation4], %s217
          %s219 = smul.u32 2, %s32
          %s221 = ssub.s32 256, 256
          %222 = vsyncadd %s215, %s221
          %s223 = smul.addr %s31, 2
          %s224 = sadd.s32 %s219, %s223
          %s225 = smul.addr %s224, 128
          %s226 = scalar_lea.hbm %s0, %s225
          %s227 = sshll.u32 %s218, 4
          %s228 = int_to_ptr.vmem [resolvable:$true] %s227
          %233 = dma.hbm_to_vmem [thread:$0]  %s226, 256, %s228, %s215, 128, 128, 8
        $region28: #{tpu_custom_call.1} parent=23 // pred_fallthru
          _
        // Predicated region
        $region29: #{tpu_custom_call.1} parent=23 // pred_check
          %p234 = pneg %p84
        $region30: #{tpu_custom_call.1} parent=23 // pred_check_branch
          %236 = sbr.rel (%p234) target = $region32
        $region31: #{tpu_custom_call.1} parent=23 // pred_region
          %s237 = sand.u32 %s74, 1
          %s238 = scalar_lea.sflag [#allocation8], %s237
          %s239 = sand.u32 %s74, 1
          %s240 = smul.addr %s239, 128
          %s241 = scalar_lea.vmem [#allocation7], %s240
          %s243 = ssub.s32 2048, 2048
          %244 = vsyncadd %s238, %s243
          %s245 = smul.addr %s31, 16
          %s246 = smul.addr %s245, 128
          %s247 = scalar_lea.hbm %s1, %s246
          %s248 = sshll.u32 %s241, 4
          %s249 = int_to_ptr.vmem [resolvable:$true] %s248
          %254 = dma.hbm_to_vmem [thread:$0]  %s247, 2048, %s249, %s238, 128, 128, 8
        $region32: #{tpu_custom_call.1} parent=23 // pred_fallthru
          _
      $region24: #{tpu_custom_call.1} parent=5 // pred_fallthru
        _
      %p255 = scmp.le.s32.totalorder 1, %s24
      %p256 = scmp.lt.s32.totalorder %s24, 3
      %p257 = pnand %p255, %p256
      %p258 = pneg %p257
      // Predicated region
      $region33: #{tpu_custom_call.1} parent=5 // pred_check
        _
      $region34: #{tpu_custom_call.1} parent=5 // pred_check_branch
        %260 = sbr.rel (%p257) target = $region36
      $region35: #{tpu_custom_call.1} parent=5 // pred_region
        %s261 = ssub.s32 %s24, 1
        %s262 = sand.u32 %s51, 1
        %s263 = scalar_lea.sflag [#allocation5], %s262
        %s264 = sand.u32 %s51, 1
        %s265 = smul.addr %s264, 16
        %s266 = scalar_lea.vmem [#allocation4], %s265
        // Predicated region
        $region37: #{tpu_custom_call.1} parent=35 // pred_check
          %p267 = pneg %p64
        $region38: #{tpu_custom_call.1} parent=35 // pred_check_branch
          %269 = sbr.rel (%p267) target = $region40
        $region39: #{tpu_custom_call.1} parent=35 // pred_region
          %270 = dma.done %s263, 256
        $region40: #{tpu_custom_call.1} parent=35 // pred_fallthru
          _
        %s271 = sand.u32 %s77, 1
        %s272 = scalar_lea.sflag [#allocation8], %s271
        %s273 = sand.u32 %s77, 1
        %s274 = smul.addr %s273, 128
        %s275 = scalar_lea.vmem [#allocation7], %s274
        // Predicated region
        $region41: #{tpu_custom_call.1} parent=35 // pred_check
          %p276 = pneg %p90
        $region42: #{tpu_custom_call.1} parent=35 // pred_check_branch
          %278 = sbr.rel (%p276) target = $region44
        $region43: #{tpu_custom_call.1} parent=35 // pred_region
          %279 = dma.done %s272, 2048
        $region44: #{tpu_custom_call.1} parent=35 // pred_fallthru
          _
        %s280 = sand.u32 %s51, 1
        %s281 = scalar_lea.sflag [#allocation5], %s280
        %s282 = sand.u32 %s51, 1
        %s283 = smul.addr %s282, 16
        %s284 = scalar_lea.vmem [#allocation4], %s283
        %p285 = pneg %p64
        %p286 = pneg %p61
        %s287 = sand.u32 %s77, 1
        %s288 = scalar_lea.sflag [#allocation8], %s287
        %s289 = sand.u32 %s77, 1
        %s290 = smul.addr %s289, 128
        %s291 = scalar_lea.vmem [#allocation7], %s290
        %p292 = pneg %p90
        %p293 = pneg %p87
        %p294 = pneg %p111
        %p295 = pneg %p108
        %p296 = pneg %p132
        %p297 = pneg %p129
        %p298 = pneg %p160
        %p299 = pneg %p157
        %s300 = sand.u32 %s147, 1
        %s301 = scalar_lea.sflag [#allocation6], %s300
        %s302 = sand.u32 %s147, 1
        %s303 = smul.addr %s302, 16
        %s304 = scalar_lea.vmem [#allocation9], %s303
        %p305 = pneg %p186
        %p306 = pneg %p183
        %s307 = sand.u32 %s173, 1
        %s308 = scalar_lea.sflag [#allocation11], %s307
        %s309 = sand.u32 %s173, 1
        %s310 = smul.addr %s309, 128
        %s311 = scalar_lea.vmem [#allocation10], %s310
        %s312 = smul.u32 2, %s34
        %s313 = smul.u32 2, %s34
        %v314 = vld [vmem:[%s2] sm:$0x1]
        %v315 = vld [vmem:[%s3] sm:$0x1]
        %p316 = scmp.eq.s32.totalorder %s34, 0
        // Predicated region
        $region45: #{tpu_custom_call.1} parent=35 // pred_check
          %p317 = pneg %p316
        $region46: #{tpu_custom_call.1} parent=35 // pred_check_branch
          %319 = sbr.rel (%p317) target = $region48
        $region47: #{tpu_custom_call.1} parent=35 // pred_region
          %v320 = vld [vmem:[%s275] sm:$0xff]
          %v321 = vld [vmem:[%s275 + $0x8] sm:$0xff]
          %v322 = vld [vmem:[%s275 + $0x10] sm:$0xff]
          %v323 = vld [vmem:[%s275 + $0x18] sm:$0xff]
          %v324 = vld [vmem:[%s275 + $0x20] sm:$0xff]
          %v325 = vld [vmem:[%s275 + $0x28] sm:$0xff]
          %v326 = vld [vmem:[%s275 + $0x30] sm:$0xff]
          %v327 = vld [vmem:[%s275 + $0x38] sm:$0xff]
          %v328 = vld [vmem:[%s275 + $0x40] sm:$0xff]
          %v329 = vld [vmem:[%s275 + $0x48] sm:$0xff]
          %v330 = vld [vmem:[%s275 + $0x50] sm:$0xff]
          %v331 = vld [vmem:[%s275 + $0x58] sm:$0xff]
          %v332 = vld [vmem:[%s275 + $0x60] sm:$0xff]
          %v333 = vld [vmem:[%s275 + $0x68] sm:$0xff]
          %v334 = vld [vmem:[%s275 + $0x70] sm:$0xff]
          %v335 = vld [vmem:[%s275 + $0x78] sm:$0xff]
          %336 = vadd.xlane.f32.xlu0 %v320
          %v337 = vpop.xlane.xlu0 %336
          %338 = vadd.xlane.f32.xlu0 %v321
          %v339 = vpop.xlane.xlu0 %338
          %340 = vadd.xlane.f32.xlu0 %v322
          %v341 = vpop.xlane.xlu0 %340
          %342 = vadd.xlane.f32.xlu0 %v323
          %v343 = vpop.xlane.xlu0 %342
          %344 = vadd.xlane.f32.xlu0 %v324
          %v345 = vpop.xlane.xlu0 %344
          %346 = vadd.xlane.f32.xlu0 %v325
          %v347 = vpop.xlane.xlu0 %346
          %348 = vadd.xlane.f32.xlu0 %v326
          %v349 = vpop.xlane.xlu0 %348
          %350 = vadd.xlane.f32.xlu0 %v327
          %v351 = vpop.xlane.xlu0 %350
          %352 = vadd.xlane.f32.xlu0 %v328
          %v353 = vpop.xlane.xlu0 %352
          %354 = vadd.xlane.f32.xlu0 %v329
          %v355 = vpop.xlane.xlu0 %354
          %356 = vadd.xlane.f32.xlu0 %v330
          %v357 = vpop.xlane.xlu0 %356
          %358 = vadd.xlane.f32.xlu0 %v331
          %v359 = vpop.xlane.xlu0 %358
          %360 = vadd.xlane.f32.xlu0 %v332
          %v361 = vpop.xlane.xlu0 %360
          %362 = vadd.xlane.f32.xlu0 %v333
          %v363 = vpop.xlane.xlu0 %362
          %364 = vadd.xlane.f32.xlu0 %v334
          %v365 = vpop.xlane.xlu0 %364
          %366 = vadd.xlane.f32.xlu0 %v335
          %v367 = vpop.xlane.xlu0 %366
          %v368 = vmul.f32 %v320, %v320
          %v369 = vmul.f32 %v321, %v321
          %v370 = vmul.f32 %v322, %v322
          %v371 = vmul.f32 %v323, %v323
          %v372 = vmul.f32 %v324, %v324
          %v373 = vmul.f32 %v325, %v325
          %v374 = vmul.f32 %v326, %v326
          %v375 = vmul.f32 %v327, %v327
          %v376 = vmul.f32 %v328, %v328
          %v377 = vmul.f32 %v329, %v329
          %v378 = vmul.f32 %v330, %v330
          %v379 = vmul.f32 %v331, %v331
          %v380 = vmul.f32 %v332, %v332
          %v381 = vmul.f32 %v333, %v333
          %v382 = vmul.f32 %v334, %v334
          %v383 = vmul.f32 %v335, %v335
          %384 = vadd.xlane.f32.xlu0 %v368
          %v385 = vpop.xlane.xlu0 %384
          %386 = vadd.xlane.f32.xlu0 %v369
          %v387 = vpop.xlane.xlu0 %386
          %388 = vadd.xlane.f32.xlu0 %v370
          %v389 = vpop.xlane.xlu0 %388
          %390 = vadd.xlane.f32.xlu0 %v371
          %v391 = vpop.xlane.xlu0 %390
          %392 = vadd.xlane.f32.xlu0 %v372
          %v393 = vpop.xlane.xlu0 %392
          %394 = vadd.xlane.f32.xlu0 %v373
          %v395 = vpop.xlane.xlu0 %394
          %396 = vadd.xlane.f32.xlu0 %v374
          %v397 = vpop.xlane.xlu0 %396
          %398 = vadd.xlane.f32.xlu0 %v375
          %v399 = vpop.xlane.xlu0 %398
          %400 = vadd.xlane.f32.xlu0 %v376
          %v401 = vpop.xlane.xlu0 %400
          %402 = vadd.xlane.f32.xlu0 %v377
          %v403 = vpop.xlane.xlu0 %402
          %404 = vadd.xlane.f32.xlu0 %v378
          %v405 = vpop.xlane.xlu0 %404
          %406 = vadd.xlane.f32.xlu0 %v379
          %v407 = vpop.xlane.xlu0 %406
          %408 = vadd.xlane.f32.xlu0 %v380
          %v409 = vpop.xlane.xlu0 %408
          %410 = vadd.xlane.f32.xlu0 %v381
          %v411 = vpop.xlane.xlu0 %410
          %412 = vadd.xlane.f32.xlu0 %v382
          %v413 = vpop.xlane.xlu0 %412
          %414 = vadd.xlane.f32.xlu0 %v383
          %v415 = vpop.xlane.xlu0 %414
          %v416 = vmul.f32 %v337, 0.03125
          %v417 = vmul.f32 %v339, 0.03125
          %v418 = vmul.f32 %v341, 0.03125
          %v419 = vmul.f32 %v343, 0.03125
          %v420 = vmul.f32 %v345, 0.03125
          %v421 = vmul.f32 %v347, 0.03125
          %v422 = vmul.f32 %v349, 0.03125
          %v423 = vmul.f32 %v351, 0.03125
          %v424 = vmul.f32 %v353, 0.03125
          %v425 = vmul.f32 %v355, 0.03125
          %v426 = vmul.f32 %v357, 0.03125
          %v427 = vmul.f32 %v359, 0.03125
          %v428 = vmul.f32 %v361, 0.03125
          %v429 = vmul.f32 %v363, 0.03125
          %v430 = vmul.f32 %v365, 0.03125
          %v431 = vmul.f32 %v367, 0.03125
          %v432 = vmul.f32 %v385, 0.03125
          %v433 = vmul.f32 %v387, 0.03125
          %v434 = vmul.f32 %v389, 0.03125
          %v435 = vmul.f32 %v391, 0.03125
          %v436 = vmul.f32 %v393, 0.03125
          %v437 = vmul.f32 %v395, 0.03125
          %v438 = vmul.f32 %v397, 0.03125
          %v439 = vmul.f32 %v399, 0.03125
          %v440 = vmul.f32 %v401, 0.03125
          %v441 = vmul.f32 %v403, 0.03125
          %v442 = vmul.f32 %v405, 0.03125
          %v443 = vmul.f32 %v407, 0.03125
          %v444 = vmul.f32 %v409, 0.03125
          %v445 = vmul.f32 %v411, 0.03125
          %v446 = vmul.f32 %v413, 0.03125
          %v447 = vmul.f32 %v415, 0.03125
          %v448 = vmul.f32 %v416, %v416
          %v449 = vmul.f32 %v417, %v417
          %v450 = vmul.f32 %v418, %v418
          %v451 = vmul.f32 %v419, %v419
          %v452 = vmul.f32 %v420, %v420
          %v453 = vmul.f32 %v421, %v421
          %v454 = vmul.f32 %v422, %v422
          %v455 = vmul.f32 %v423, %v423
          %v456 = vmul.f32 %v424, %v424
          %v457 = vmul.f32 %v425, %v425
          %v458 = vmul.f32 %v426, %v426
          %v459 = vmul.f32 %v427, %v427
          %v460 = vmul.f32 %v428, %v428
          %v461 = vmul.f32 %v429, %v429
          %v462 = vmul.f32 %v430, %v430
          %v463 = vmul.f32 %v431, %v431
          %v464 = vsub.f32 %v432, %v448
          %v465 = vsub.f32 %v433, %v449
          %v466 = vsub.f32 %v434, %v450
          %v467 = vsub.f32 %v435, %v451
          %v468 = vsub.f32 %v436, %v452
          %v469 = vsub.f32 %v437, %v453
          %v470 = vsub.f32 %v438, %v454
          %v471 = vsub.f32 %v439, %v455
          %v472 = vsub.f32 %v440, %v456
          %v473 = vsub.f32 %v441, %v457
          %v474 = vsub.f32 %v442, %v458
          %v475 = vsub.f32 %v443, %v459
          %v476 = vsub.f32 %v444, %v460
          %v477 = vsub.f32 %v445, %v461
          %v478 = vsub.f32 %v446, %v462
          %v479 = vsub.f32 %v447, %v463
          %v480 = vsub.f32 %v320, %v416
          %v481 = vsub.f32 %v321, %v417
          %v482 = vsub.f32 %v322, %v418
          %v483 = vsub.f32 %v323, %v419
          %v484 = vsub.f32 %v324, %v420
          %v485 = vsub.f32 %v325, %v421
          %v486 = vsub.f32 %v326, %v422
          %v487 = vsub.f32 %v327, %v423
          %v488 = vsub.f32 %v328, %v424
          %v489 = vsub.f32 %v329, %v425
          %v490 = vsub.f32 %v330, %v426
          %v491 = vsub.f32 %v331, %v427
          %v492 = vsub.f32 %v332, %v428
          %v493 = vsub.f32 %v333, %v429
          %v494 = vsub.f32 %v334, %v430
          %v495 = vsub.f32 %v335, %v431
          %v496 = vadd.f32 %v464, 1e-05
          %v497 = vadd.f32 %v465, 1e-05
          %v498 = vadd.f32 %v466, 1e-05
          %v499 = vadd.f32 %v467, 1e-05
          %v500 = vadd.f32 %v468, 1e-05
          %v501 = vadd.f32 %v469, 1e-05
          %v502 = vadd.f32 %v470, 1e-05
          %v503 = vadd.f32 %v471, 1e-05
          %v504 = vadd.f32 %v472, 1e-05
          %v505 = vadd.f32 %v473, 1e-05
          %v506 = vadd.f32 %v474, 1e-05
          %v507 = vadd.f32 %v475, 1e-05
          %v508 = vadd.f32 %v476, 1e-05
          %v509 = vadd.f32 %v477, 1e-05
          %v510 = vadd.f32 %v478, 1e-05
          %v511 = vadd.f32 %v479, 1e-05
          %v512 = vrsqrt.pop %v496
          %v513 = vrsqrt.pop %v497
          %v514 = vrsqrt.pop %v498
          %v515 = vrsqrt.pop %v499
          %v516 = vrsqrt.pop %v500
          %v517 = vrsqrt.pop %v501
          %v518 = vrsqrt.pop %v502
          %v519 = vrsqrt.pop %v503
          %v520 = vrsqrt.pop %v504
          %v521 = vrsqrt.pop %v505
          %v522 = vrsqrt.pop %v506
          %v523 = vrsqrt.pop %v507
          %v524 = vrsqrt.pop %v508
          %v525 = vrsqrt.pop %v509
          %v526 = vrsqrt.pop %v510
          %v527 = vrsqrt.pop %v511
          %v528 = vmul.f32 %v480, %v512
          %v529 = vmul.f32 %v481, %v513
          %v530 = vmul.f32 %v482, %v514
          %v531 = vmul.f32 %v483, %v515
          %v532 = vmul.f32 %v484, %v516
          %v533 = vmul.f32 %v485, %v517
          %v534 = vmul.f32 %v486, %v518
          %v535 = vmul.f32 %v487, %v519
          %v536 = vmul.f32 %v488, %v520
          %v537 = vmul.f32 %v489, %v521
          %v538 = vmul.f32 %v490, %v522
          %v539 = vmul.f32 %v491, %v523
          %v540 = vmul.f32 %v492, %v524
          %v541 = vmul.f32 %v493, %v525
          %v542 = vmul.f32 %v494, %v526
          %v543 = vmul.f32 %v495, %v527
          %v545 = vlaneseq
          %v546 = vshrl.u32 %v545, 7
          %v547 = vsub.s32 0, %v546
          %v548 = vrot.slane %v314, %v547
          %v550 = vmul.f32 %v528, %v548
          %v551 = vmul.f32 %v529, %v548
          %v552 = vmul.f32 %v530, %v548
          %v553 = vmul.f32 %v531, %v548
          %v554 = vmul.f32 %v532, %v548
          %v555 = vmul.f32 %v533, %v548
          %v556 = vmul.f32 %v534, %v548
          %v557 = vmul.f32 %v535, %v548
          %v558 = vmul.f32 %v536, %v548
          %v559 = vmul.f32 %v537, %v548
          %v560 = vmul.f32 %v538, %v548
          %v561 = vmul.f32 %v539, %v548
          %v562 = vmul.f32 %v540, %v548
          %v563 = vmul.f32 %v541, %v548
          %v564 = vmul.f32 %v542, %v548
          %v565 = vmul.f32 %v543, %v548
          %v567 = vlaneseq
          %v568 = vshrl.u32 %v567, 7
          %v569 = vsub.s32 0, %v568
          %v570 = vrot.slane %v315, %v569
          %v572 = vadd.f32 %v550, %v570
          %v573 = vadd.f32 %v551, %v570
          %v574 = vadd.f32 %v552, %v570
          %v575 = vadd.f32 %v553, %v570
          %v576 = vadd.f32 %v554, %v570
          %v577 = vadd.f32 %v555, %v570
          %v578 = vadd.f32 %v556, %v570
          %v579 = vadd.f32 %v557, %v570
          %v580 = vadd.f32 %v558, %v570
          %v581 = vadd.f32 %v559, %v570
          %v582 = vadd.f32 %v560, %v570
          %v583 = vadd.f32 %v561, %v570
          %v584 = vadd.f32 %v562, %v570
          %v585 = vadd.f32 %v563, %v570
          %v586 = vadd.f32 %v564, %v570
          %v587 = vadd.f32 %v565, %v570
          %588 = vst [vmem:[#allocation2] sm:$0xff] %v572
          %589 = vst [vmem:[#allocation2 + $0x8] sm:$0xff] %v573
          %590 = vst [vmem:[#allocation2 + $0x10] sm:$0xff] %v574
          %591 = vst [vmem:[#allocation2 + $0x18] sm:$0xff] %v575
          %592 = vst [vmem:[#allocation2 + $0x20] sm:$0xff] %v576
          %593 = vst [vmem:[#allocation2 + $0x28] sm:$0xff] %v577
          %594 = vst [vmem:[#allocation2 + $0x30] sm:$0xff] %v578
          %595 = vst [vmem:[#allocation2 + $0x38] sm:$0xff] %v579
          %596 = vst [vmem:[#allocation2 + $0x40] sm:$0xff] %v580
          %597 = vst [vmem:[#allocation2 + $0x48] sm:$0xff] %v581
          %598 = vst [vmem:[#allocation2 + $0x50] sm:$0xff] %v582
          %599 = vst [vmem:[#allocation2 + $0x58] sm:$0xff] %v583
          %600 = vst [vmem:[#allocation2 + $0x60] sm:$0xff] %v584
          %601 = vst [vmem:[#allocation2 + $0x68] sm:$0xff] %v585
          %602 = vst [vmem:[#allocation2 + $0x70] sm:$0xff] %v586
          %603 = vst [vmem:[#allocation2 + $0x78] sm:$0xff] %v587
          %604 = vst [vmem:[#allocation3] sm:$0xff] 0.0
          %605 = vst [vmem:[#allocation3 + $0x8] sm:$0xff] 0.0
          %606 = vst [vmem:[#allocation3 + $0x10] sm:$0xff] 0.0
          %607 = vst [vmem:[#allocation3 + $0x18] sm:$0xff] 0.0
          %608 = vst [vmem:[#allocation3 + $0x20] sm:$0xff] 0.0
          %609 = vst [vmem:[#allocation3 + $0x28] sm:$0xff] 0.0
          %610 = vst [vmem:[#allocation3 + $0x30] sm:$0xff] 0.0
          %611 = vst [vmem:[#allocation3 + $0x38] sm:$0xff] 0.0
          %612 = vst [vmem:[#allocation3 + $0x40] sm:$0xff] 0.0
          %613 = vst [vmem:[#allocation3 + $0x48] sm:$0xff] 0.0
          %614 = vst [vmem:[#allocation3 + $0x50] sm:$0xff] 0.0
          %615 = vst [vmem:[#allocation3 + $0x58] sm:$0xff] 0.0
          %616 = vst [vmem:[#allocation3 + $0x60] sm:$0xff] 0.0
          %617 = vst [vmem:[#allocation3 + $0x68] sm:$0xff] 0.0
          %618 = vst [vmem:[#allocation3 + $0x70] sm:$0xff] 0.0
          %619 = vst [vmem:[#allocation3 + $0x78] sm:$0xff] 0.0
        $region48: #{tpu_custom_call.1} parent=35 // pred_fallthru
          _
        %v620 = vld [vmem:[%s266] sm:$0xff]
        %v621 = vld [vmem:[%s266 + $0x8] sm:$0xff]
        %622 = vadd.xlane.f32.xlu0 %v620
        %v623 = vpop.xlane.xlu0 %622
        %624 = vadd.xlane.f32.xlu0 %v621
        %v625 = vpop.xlane.xlu0 %624
        %v626 = vmul.f32 %v620, %v620
        %v627 = vmul.f32 %v621, %v621
        %628 = vadd.xlane.f32.xlu0 %v626
        %v629 = vpop.xlane.xlu0 %628
        %630 = vadd.xlane.f32.xlu0 %v627
        %v631 = vpop.xlane.xlu0 %630
        %v632 = vmul.f32 %v623, 0.03125
        %v633 = vmul.f32 %v625, 0.03125
        %v634 = vmul.f32 %v629, 0.03125
        %v635 = vmul.f32 %v631, 0.03125
        %v636 = vmul.f32 %v632, %v632
        %v637 = vmul.f32 %v633, %v633
        %v638 = vsub.f32 %v634, %v636
        %v639 = vsub.f32 %v635, %v637
        %v640 = vsub.f32 %v620, %v632
        %v641 = vsub.f32 %v621, %v633
        %v642 = vadd.f32 %v638, 1e-05
        %v643 = vadd.f32 %v639, 1e-05
        %v644 = vrsqrt.pop %v642
        %v645 = vrsqrt.pop %v643
        %v646 = vmul.f32 %v640, %v644
        %v647 = vmul.f32 %v641, %v645
        %v649 = vlaneseq
        %v650 = vshrl.u32 %v649, 7
        %v651 = vsub.s32 0, %v650
        %v652 = vrot.slane %v314, %v651
        %v654 = vmul.f32 %v646, %v652
        %v655 = vmul.f32 %v647, %v652
        %v657 = vlaneseq
        %v658 = vshrl.u32 %v657, 7
        %v659 = vsub.s32 0, %v658
        %v660 = vrot.slane %v315, %v659
        %v662 = vadd.f32 %v654, %v660
        %v663 = vadd.f32 %v655, %v660
        %v664 = vmul.f32 %v662, 0.17677669
        %v665 = vmul.f32 %v663, 0.17677669
        %v666 = vld [vmem:[#allocation2] sm:$0xff]
        %v667 = vld [vmem:[#allocation2 + $0x8] sm:$0xff]
        %v668 = vld [vmem:[#allocation2 + $0x10] sm:$0xff]
        %v669 = vld [vmem:[#allocation2 + $0x18] sm:$0xff]
        %v670 = vld [vmem:[#allocation2 + $0x20] sm:$0xff]
        %v671 = vld [vmem:[#allocation2 + $0x28] sm:$0xff]
        %v672 = vld [vmem:[#allocation2 + $0x30] sm:$0xff]
        %v673 = vld [vmem:[#allocation2 + $0x38] sm:$0xff]
        %v674 = vld [vmem:[#allocation2 + $0x40] sm:$0xff]
        %v675 = vld [vmem:[#allocation2 + $0x48] sm:$0xff]
        %v676 = vld [vmem:[#allocation2 + $0x50] sm:$0xff]
        %v677 = vld [vmem:[#allocation2 + $0x58] sm:$0xff]
        %v678 = vld [vmem:[#allocation2 + $0x60] sm:$0xff]
        %v679 = vld [vmem:[#allocation2 + $0x68] sm:$0xff]
        %v680 = vld [vmem:[#allocation2 + $0x70] sm:$0xff]
        %v681 = vld [vmem:[#allocation2 + $0x78] sm:$0xff]
        %682 = vmatprep.subr.mxu0 0.0
        %683 = vmatpush1.xpose.msra.mxu0 %v666
        %684 = vmatprep.subr.mxu0 0.0
        %685 = vmatpush1.xpose.msra.mxu0 %v667
        %686 = vmatprep.subr.mxu0 0.0
        %687 = vmatpush1.xpose.msra.mxu0 %v668
        %688 = vmatprep.subr.mxu0 0.0
        %689 = vmatpush1.xpose.msra.mxu0 %v669
        %690 = vmatprep.subr.mxu0 0.0
        %691 = vmatpush1.xpose.msra.mxu0 %v670
        %692 = vmatprep.subr.mxu0 0.0
        %693 = vmatpush1.xpose.msra.mxu0 %v671
        %694 = vmatprep.subr.mxu0 0.0
        %695 = vmatpush1.xpose.msra.mxu0 %v672
        %696 = vmatprep.subr.mxu0 0.0
        %697 = vmatpush1.xpose.msra.mxu0 %v673
        %698 = vmatprep.subr.mxu0 0.0
        %699 = vmatpush1.xpose.msra.mxu0 %v674
        %700 = vmatprep.subr.mxu0 0.0
        %701 = vmatpush1.xpose.msra.mxu0 %v675
        %702 = vmatprep.subr.mxu0 0.0
        %703 = vmatpush1.xpose.msra.mxu0 %v676
        %704 = vmatprep.subr.mxu0 0.0
        %705 = vmatpush1.xpose.msra.mxu0 %v677
        %706 = vmatprep.subr.mxu0 0.0
        %707 = vmatpush1.xpose.msra.mxu0 %v678
        %708 = vmatprep.subr.mxu0 0.0
        %709 = vmatpush1.xpose.msra.mxu0 %v679
        %710 = vmatprep.subr.mxu0 0.0
        %711 = vmatpush1.xpose.msra.mxu0 %v680
        %712 = vmatprep.subr.mxu0 0.0
        %713 = vmatpush1.xpose.msra.mxu0 %v681
        %714 = vmatprep.subr.mxu0 0.0
        %715 = vmatpush1.xpose.msra.mxu0 0.0
        %716 = vmatprep.subr.mxu0 0.0
        %717 = vmatpush1.xpose.msra.mxu0 0.0
        %718 = vmatprep.subr.mxu0 0.0
        %719 = vmatpush1.xpose.msra.mxu0 0.0
        %720 = vmatprep.subr.mxu0 0.0
        %721 = vmatpush1.xpose.msra.mxu0 0.0
        %722 = vmatprep.subr.mxu0 0.0
        %723 = vmatpush1.xpose.msra.mxu0 0.0
        %724 = vmatprep.subr.mxu0 0.0
        %725 = vmatpush1.xpose.msra.mxu0 0.0
        %726 = vmatprep.subr.mxu0 0.0
        %727 = vmatpush1.xpose.msra.mxu0 0.0
        %728 = vmatprep.subr.mxu0 0.0
        %729 = vmatpush1.xpose.msra.mxu0 0.0
        %730 = vmatprep.subr.mxu0 0.0
        %731 = vmatpush1.xpose.msra.mxu0 0.0
        %732 = vmatprep.subr.mxu0 0.0
        %733 = vmatpush1.xpose.msra.mxu0 0.0
        %734 = vmatprep.subr.mxu0 0.0
        %735 = vmatpush1.xpose.msra.mxu0 0.0
        %736 = vmatprep.subr.mxu0 0.0
        %737 = vmatpush1.xpose.msra.mxu0 0.0
        %738 = vmatprep.subr.mxu0 0.0
        %739 = vmatpush1.xpose.msra.mxu0 0.0
        %740 = vmatprep.subr.mxu0 0.0
        %741 = vmatpush1.xpose.msra.mxu0 0.0
        %742 = vmatprep.subr.mxu0 0.0
        %743 = vmatpush1.xpose.msra.mxu0 0.0
        %744 = vmatprep.subr.mxu0 0.0
        %745 = vmatpush1.xpose.msra.mxu0 0.0
        %746 = vmatprep.mubr.f32.mxu0 0.0
        %747 = vmatmul.mubr.f32.gmra.mrb[0].mxu0 %v664
        %v748 = vpop.f32.mrb[0].mxu0
        %v749 = vadd.f32 0.0, %v748
        %v750 = vpop.f32.mrb[0].mxu0
        %751 = vmatprep.mubr.f32.mxu0 0.0
        %752 = vmatmul.mubr.f32.gmra.mrb[0].mxu0 %v665
        %v753 = vpop.f32.mrb[0].mxu0
        %v754 = vadd.f32 0.0, %v753
        %v755 = vpop.f32.mrb[0].mxu0
        %756 = vdwg.mxu0
        %v757 = vlaneseq
        %v758 = vand.u32 %v757, 127
        %vm759 = vcmp.lt.s32.totalorder %v758, 8
        %v760 = vsel %vm759, %v749, -1e+30
        %v761 = vsel %vm759, %v754, -1e+30
        %762 = vmax.xlane.f32.xlu0 %v760
        %v763 = vpop.xlane.xlu0 %762
        %764 = vmax.xlane.f32.xlu0 %v761
        %v765 = vpop.xlane.xlu0 %764
        %v766 = vsub.f32 %v760, %v763
        %v767 = vsub.f32 %v761, %v765
        %v768 = vmul.f32 %v766, 1.442695
        %v769 = vpow.pop %v768
        %v770 = vmul.f32 %v767, 1.442695
        %v771 = vpow.pop %v770
        %772 = vadd.xlane.f32.xlu0 %v769
        %v773 = vpop.xlane.xlu0 %772
        %774 = vadd.xlane.f32.xlu0 %v771
        %v775 = vpop.xlane.xlu0 %774
        %v776 = vrcp.pop %v773
        %v777 = vrcp.pop %v775
        %v778 = vmul.f32 %v769, %v776
        %v779 = vmul.f32 %v771, %v777
        %780 = vmatprep.subr.mxu0 0.0
        %781 = vmatpush1.msra.mxu0 %v666
        %782 = vmatprep.subr.mxu0 0.0
        %783 = vmatpush1.msra.mxu0 %v667
        %784 = vmatprep.subr.mxu0 0.0
        %785 = vmatpush1.msra.mxu0 %v668
        %786 = vmatprep.subr.mxu0 0.0
        %787 = vmatpush1.msra.mxu0 %v669
        %788 = vmatprep.subr.mxu0 0.0
        %789 = vmatpush1.msra.mxu0 %v670
        %790 = vmatprep.subr.mxu0 0.0
        %791 = vmatpush1.msra.mxu0 %v671
        %792 = vmatprep.subr.mxu0 0.0
        %793 = vmatpush1.msra.mxu0 %v672
        %794 = vmatprep.subr.mxu0 0.0
        %795 = vmatpush1.msra.mxu0 %v673
        %796 = vmatprep.subr.mxu0 0.0
        %797 = vmatpush1.msra.mxu0 %v674
        %798 = vmatprep.subr.mxu0 0.0
        %799 = vmatpush1.msra.mxu0 %v675
        %800 = vmatprep.subr.mxu0 0.0
        %801 = vmatpush1.msra.mxu0 %v676
        %802 = vmatprep.subr.mxu0 0.0
        %803 = vmatpush1.msra.mxu0 %v677
        %804 = vmatprep.subr.mxu0 0.0
        %805 = vmatpush1.msra.mxu0 %v678
        %806 = vmatprep.subr.mxu0 0.0
        %807 = vmatpush1.msra.mxu0 %v679
        %808 = vmatprep.subr.mxu0 0.0
        %809 = vmatpush1.msra.mxu0 %v680
        %810 = vmatprep.subr.mxu0 0.0
        %811 = vmatpush1.msra.mxu0 %v681
        %812 = vmatprep.subr.mxu0 0.0
        %813 = vmatpush1.msra.mxu0 0.0
        %814 = vmatprep.subr.mxu0 0.0
        %815 = vmatpush1.msra.mxu0 0.0
        %816 = vmatprep.subr.mxu0 0.0
        %817 = vmatpush1.msra.mxu0 0.0
        %818 = vmatprep.subr.mxu0 0.0
        %819 = vmatpush1.msra.mxu0 0.0
        %820 = vmatprep.subr.mxu0 0.0
        %821 = vmatpush1.msra.mxu0 0.0
        %822 = vmatprep.subr.mxu0 0.0
        %823 = vmatpush1.msra.mxu0 0.0
        %824 = vmatprep.subr.mxu0 0.0
        %825 = vmatpush1.msra.mxu0 0.0
        %826 = vmatprep.subr.mxu0 0.0
        %827 = vmatpush1.msra.mxu0 0.0
        %828 = vmatprep.subr.mxu0 0.0
        %829 = vmatpush1.msra.mxu0 0.0
        %830 = vmatprep.subr.mxu0 0.0
        %831 = vmatpush1.msra.mxu0 0.0
        %832 = vmatprep.subr.mxu0 0.0
        %833 = vmatpush1.msra.mxu0 0.0
        %834 = vmatprep.subr.mxu0 0.0
        %835 = vmatpush1.msra.mxu0 0.0
        %836 = vmatprep.subr.mxu0 0.0
        %837 = vmatpush1.msra.mxu0 0.0
        %838 = vmatprep.subr.mxu0 0.0
        %839 = vmatpush1.msra.mxu0 0.0
        %840 = vmatprep.subr.mxu0 0.0
        %841 = vmatpush1.msra.mxu0 0.0
        %842 = vmatprep.subr.mxu0 0.0
        %843 = vmatpush1.msra.mxu0 0.0
        %844 = vmatprep.mubr.f32.mxu0 0.0
        %845 = vmatmul.mubr.f32.gmra.mrb[0].mxu0 %v778
        %v846 = vpop.f32.mrb[0].mxu0
        %v847 = vadd.f32 0.0, %v846
        %v848 = vpop.f32.mrb[0].mxu0
        %849 = vmatprep.mubr.f32.mxu0 0.0
        %850 = vmatmul.mubr.f32.gmra.mrb[0].mxu0 %v779
        %v851 = vpop.f32.mrb[0].mxu0
        %v852 = vadd.f32 0.0, %v851
        %v853 = vpop.f32.mrb[0].mxu0
        %854 = vdwg.mxu0
        %v855 = vmul.f32 %v662, 0.5
        %v856 = vmul.f32 %v663, 0.5
        %v857 = vmul.f32 %v847, 0.5
        %v858 = vmul.f32 %v852, 0.5
        %v859 = vadd.f32 %v855, %v857
        %v860 = vadd.f32 %v856, %v858
        %861 = vst [vmem:[%s304] sm:$0xff] %v859
        %862 = vst [vmem:[%s304 + $0x8] sm:$0xff] %v860
        %v863 = vld [vmem:[#allocation3] sm:$0xff]
        %v864 = vld [vmem:[#allocation3 + $0x8] sm:$0xff]
        %v865 = vld [vmem:[#allocation3 + $0x10] sm:$0xff]
        %v866 = vld [vmem:[#allocation3 + $0x18] sm:$0xff]
        %v867 = vld [vmem:[#allocation3 + $0x20] sm:$0xff]
        %v868 = vld [vmem:[#allocation3 + $0x28] sm:$0xff]
        %v869 = vld [vmem:[#allocation3 + $0x30] sm:$0xff]
        %v870 = vld [vmem:[#allocation3 + $0x38] sm:$0xff]
        %v871 = vld [vmem:[#allocation3 + $0x40] sm:$0xff]
        %v872 = vld [vmem:[#allocation3 + $0x48] sm:$0xff]
        %v873 = vld [vmem:[#allocation3 + $0x50] sm:$0xff]
        %v874 = vld [vmem:[#allocation3 + $0x58] sm:$0xff]
        %v875 = vld [vmem:[#allocation3 + $0x60] sm:$0xff]
        %v876 = vld [vmem:[#allocation3 + $0x68] sm:$0xff]
        %v877 = vld [vmem:[#allocation3 + $0x70] sm:$0xff]
        %v878 = vld [vmem:[#allocation3 + $0x78] sm:$0xff]
        %879 = vxpose.xlu0.b32.start [1/16] %v778, 128
        %880 = vxpose.xlu0.b32.cont [2/16] %v779, 128
        %881 = vxpose.xlu0.b32.cont [3/16] 0.0, 128
        %882 = vxpose.xlu0.b32.cont [4/16] 0.0, 128
        %883 = vxpose.xlu0.b32.cont [5/16] 0.0, 128
        %884 = vxpose.xlu0.b32.cont [6/16] 0.0, 128
        %885 = vxpose.xlu0.b32.cont [7/16] 0.0, 128
        %886 = vxpose.xlu0.b32.cont [8/16] 0.0, 128
        %887 = vxpose.xlu0.b32.cont [9/16] 0.0, 128
        %888 = vxpose.xlu0.b32.cont [10/16] 0.0, 128
        %889 = vxpose.xlu0.b32.cont [11/16] 0.0, 128
        %890 = vxpose.xlu0.b32.cont [12/16] 0.0, 128
        %891 = vxpose.xlu0.b32.cont [13/16] 0.0, 128
        %892 = vxpose.xlu0.b32.cont [14/16] 0.0, 128
        %893 = vxpose.xlu0.b32.cont [15/16] 0.0, 128
        %894 = vxpose.xlu0.b32.end [16/16] 0.0, 128
        %v895 = vpop.trf.xlu0
        %v896 = vpop.trf.xlu0
        %v897 = vpop.trf.xlu0
        %v898 = vpop.trf.xlu0
        %v899 = vpop.trf.xlu0
        %v900 = vpop.trf.xlu0
        %v901 = vpop.trf.xlu0
        %v902 = vpop.trf.xlu0
        %v903 = vpop.trf.xlu0
        %v904 = vpop.trf.xlu0
        %v905 = vpop.trf.xlu0
        %v906 = vpop.trf.xlu0
        %v907 = vpop.trf.xlu0
        %v908 = vpop.trf.xlu0
        %v909 = vpop.trf.xlu0
        %v910 = vpop.trf.xlu0
        %vm911 = vcmask 130048
        %v913 = vsel %vm911, %v895, 0
        %v916 = vsel %vm911, %v896, 0
        %v919 = vsel %vm911, %v897, 0
        %v922 = vsel %vm911, %v898, 0
        %v925 = vsel %vm911, %v899, 0
        %v928 = vsel %vm911, %v900, 0
        %v931 = vsel %vm911, %v901, 0
        %v934 = vsel %vm911, %v902, 0
        %v937 = vsel %vm911, %v903, 0
        %v940 = vsel %vm911, %v904, 0
        %v943 = vsel %vm911, %v905, 0
        %v946 = vsel %vm911, %v906, 0
        %v949 = vsel %vm911, %v907, 0
        %v952 = vsel %vm911, %v908, 0
        %v955 = vsel %vm911, %v909, 0
        %v958 = vsel %vm911, %v910, 0
        %960 = vmatprep.subr.mxu0 0.0
        %961 = vmatpush1.msra.mxu0 %v664
        %962 = vmatprep.subr.mxu0 0.0
        %963 = vmatpush1.msra.mxu0 %v665
        %964 = vmatprep.subr.mxu0 0.0
        %965 = vmatpush1.msra.mxu0 0.0
        %966 = vmatprep.subr.mxu0 0.0
        %967 = vmatpush1.msra.mxu0 0.0
        %968 = vmatprep.subr.mxu0 0.0
        %969 = vmatpush1.msra.mxu0 0.0
        %970 = vmatprep.subr.mxu0 0.0
        %971 = vmatpush1.msra.mxu0 0.0
        %972 = vmatprep.subr.mxu0 0.0
        %973 = vmatpush1.msra.mxu0 0.0
        %974 = vmatprep.subr.mxu0 0.0
        %975 = vmatpush1.msra.mxu0 0.0
        %976 = vmatprep.subr.mxu0 0.0
        %977 = vmatpush1.msra.mxu0 0.0
        %978 = vmatprep.subr.mxu0 0.0
        %979 = vmatpush1.msra.mxu0 0.0
        %980 = vmatprep.subr.mxu0 0.0
        %981 = vmatpush1.msra.mxu0 0.0
        %982 = vmatprep.subr.mxu0 0.0
        %983 = vmatpush1.msra.mxu0 0.0
        %984 = vmatprep.subr.mxu0 0.0
        %985 = vmatpush1.msra.mxu0 0.0
        %986 = vmatprep.subr.mxu0 0.0
        %987 = vmatpush1.msra.mxu0 0.0
        %988 = vmatprep.subr.mxu0 0.0
        %989 = vmatpush1.msra.mxu0 0.0
        %990 = vmatprep.subr.mxu0 0.0
        %991 = vmatpush1.msra.mxu0 0.0
        %992 = vmatprep.subr.mxu0 0.0
        %993 = vmatpush1.msra.mxu0 0.0
        %994 = vmatprep.subr.mxu0 0.0
        %995 = vmatpush1.msra.mxu0 0.0
        %996 = vmatprep.subr.mxu0 0.0
        %997 = vmatpush1.msra.mxu0 0.0
        %998 = vmatprep.subr.mxu0 0.0
        %999 = vmatpush1.msra.mxu0 0.0
        %1000 = vmatprep.subr.mxu0 0.0
        %1001 = vmatpush1.msra.mxu0 0.0
        %1002 = vmatprep.subr.mxu0 0.0
        %1003 = vmatpush1.msra.mxu0 0.0
        %1004 = vmatprep.subr.mxu0 0.0
        %1005 = vmatpush1.msra.mxu0 0.0
        %1006 = vmatprep.subr.mxu0 0.0
        %1007 = vmatpush1.msra.mxu0 0.0
        %1008 = vmatprep.subr.mxu0 0.0
        %1009 = vmatpush1.msra.mxu0 0.0
        %1010 = vmatprep.subr.mxu0 0.0
        %1011 = vmatpush1.msra.mxu0 0.0
        %1012 = vmatprep.subr.mxu0 0.0
        %1013 = vmatpush1.msra.mxu0 0.0
        %1014 = vmatprep.subr.mxu0 0.0
        %1015 = vmatpush1.msra.mxu0 0.0
        %1016 = vmatprep.subr.mxu0 0.0
        %1017 = vmatpush1.msra.mxu0 0.0
        %1018 = vmatprep.subr.mxu0 0.0
        %1019 = vmatpush1.msra.mxu0 0.0
        %1020 = vmatprep.subr.mxu0 0.0
        %1021 = vmatpush1.msra.mxu0 0.0
        %1022 = vmatprep.subr.mxu0 0.0
        %1023 = vmatpush1.msra.mxu0 0.0
        %1024 = vmatprep.mubr.f32.mxu0 0.0
        %1025 = vmatmul.mubr.f32.gmra.mrb[0].mxu0 %v913
        %v1026 = vpop.f32.mrb[0].mxu0
        %v1027 = vadd.f32 0.0, %v1026
        %v1028 = vpop.f32.mrb[0].mxu0
        %1029 = vmatprep.mubr.f32.mxu0 0.0
        %1030 = vmatmul.mubr.f32.gmra.mrb[0].mxu0 %v916
        %v1031 = vpop.f32.mrb[0].mxu0
        %v1032 = vadd.f32 0.0, %v1031
        %v1033 = vpop.f32.mrb[0].mxu0
        %1034 = vmatprep.mubr.f32.mxu0 0.0
        %1035 = vmatmul.mubr.f32.gmra.mrb[0].mxu0 %v919
        %v1036 = vpop.f32.mrb[0].mxu0
        %v1037 = vadd.f32 0.0, %v1036
        %v1038 = vpop.f32.mrb[0].mxu0
        %1039 = vmatprep.mubr.f32.mxu0 0.0
        %1040 = vmatmul.mubr.f32.gmra.mrb[0].mxu0 %v922
        %v1041 = vpop.f32.mrb[0].mxu0
        %v1042 = vadd.f32 0.0, %v1041
        %v1043 = vpop.f32.mrb[0].mxu0
        %1044 = vmatprep.mubr.f32.mxu0 0.0
        %1045 = vmatmul.mubr.f32.gmra.mrb[0].mxu0 %v925
        %v1046 = vpop.f32.mrb[0].mxu0
        %v1047 = vadd.f32 0.0, %v1046
        %v1048 = vpop.f32.mrb[0].mxu0
        %1049 = vmatprep.mubr.f32.mxu0 0.0
        %1050 = vmatmul.mubr.f32.gmra.mrb[0].mxu0 %v928
        %v1051 = vpop.f32.mrb[0].mxu0
        %v1052 = vadd.f32 0.0, %v1051
        %v1053 = vpop.f32.mrb[0].mxu0
        %1054 = vmatprep.mubr.f32.mxu0 0.0
        %1055 = vmatmul.mubr.f32.gmra.mrb[0].mxu0 %v931
        %v1056 = vpop.f32.mrb[0].mxu0
        %v1057 = vadd.f32 0.0, %v1056
        %v1058 = vpop.f32.mrb[0].mxu0
        %1059 = vmatprep.mubr.f32.mxu0 0.0
        %1060 = vmatmul.mubr.f32.gmra.mrb[0].mxu0 %v934
        %v1061 = vpop.f32.mrb[0].mxu0
        %v1062 = vadd.f32 0.0, %v1061
        %v1063 = vpop.f32.mrb[0].mxu0
        %1064 = vmatprep.mubr.f32.mxu0 0.0
        %1065 = vmatmul.mubr.f32.gmra.mrb[0].mxu0 %v937
        %v1066 = vpop.f32.mrb[0].mxu0
        %v1067 = vadd.f32 0.0, %v1066
        %v1068 = vpop.f32.mrb[0].mxu0
        %1069 = vmatprep.mubr.f32.mxu0 0.0
        %1070 = vmatmul.mubr.f32.gmra.mrb[0].mxu0 %v940
        %v1071 = vpop.f32.mrb[0].mxu0
        %v1072 = vadd.f32 0.0, %v1071
        %v1073 = vpop.f32.mrb[0].mxu0
        %1074 = vmatprep.mubr.f32.mxu0 0.0
        %1075 = vmatmul.mubr.f32.gmra.mrb[0].mxu0 %v943
        %v1076 = vpop.f32.mrb[0].mxu0
        %v1077 = vadd.f32 0.0, %v1076
        %v1078 = vpop.f32.mrb[0].mxu0
        %1079 = vmatprep.mubr.f32.mxu0 0.0
        %1080 = vmatmul.mubr.f32.gmra.mrb[0].mxu0 %v946
        %v1081 = vpop.f32.mrb[0].mxu0
        %v1082 = vadd.f32 0.0, %v1081
        %v1083 = vpop.f32.mrb[0].mxu0
        %1084 = vmatprep.mubr.f32.mxu0 0.0
        %1085 = vmatmul.mubr.f32.gmra.mrb[0].mxu0 %v949
        %v1086 = vpop.f32.mrb[0].mxu0
        %v1087 = vadd.f32 0.0, %v1086
        %v1088 = vpop.f32.mrb[0].mxu0
        %1089 = vmatprep.mubr.f32.mxu0 0.0
        %1090 = vmatmul.mubr.f32.gmra.mrb[0].mxu0 %v952
        %v1091 = vpop.f32.mrb[0].mxu0
        %v1092 = vadd.f32 0.0, %v1091
        %v1093 = vpop.f32.mrb[0].mxu0
        %1094 = vmatprep.mubr.f32.mxu0 0.0
        %1095 = vmatmul.mubr.f32.gmra.mrb[0].mxu0 %v955
        %v1096 = vpop.f32.mrb[0].mxu0
        %v1097 = vadd.f32 0.0, %v1096
        %v1098 = vpop.f32.mrb[0].mxu0
        %1099 = vmatprep.mubr.f32.mxu0 0.0
        %1100 = vmatmul.mubr.f32.gmra.mrb[0].mxu0 %v958
        %v1101 = vpop.f32.mrb[0].mxu0
        %v1102 = vadd.f32 0.0, %v1101
        %v1103 = vpop.f32.mrb[0].mxu0
        %1104 = vdwg.mxu0
        %v1105 = vadd.f32 %v863, %v1027
        %v1106 = vadd.f32 %v864, %v1032
        %v1107 = vadd.f32 %v865, %v1037
        %v1108 = vadd.f32 %v866, %v1042
        %v1109 = vadd.f32 %v867, %v1047
        %v1110 = vadd.f32 %v868, %v1052
        %v1111 = vadd.f32 %v869, %v1057
        %v1112 = vadd.f32 %v870, %v1062
        %v1113 = vadd.f32 %v871, %v1067
        %v1114 = vadd.f32 %v872, %v1072
        %v1115 = vadd.f32 %v873, %v1077
        %v1116 = vadd.f32 %v874, %v1082
        %v1117 = vadd.f32 %v875, %v1087
        %v1118 = vadd.f32 %v876, %v1092
        %v1119 = vadd.f32 %v877, %v1097
        %v1120 = vadd.f32 %v878, %v1102
        %1121 = vst [vmem:[#allocation3] sm:$0xff] %v1105
        %1122 = vst [vmem:[#allocation3 + $0x8] sm:$0xff] %v1106
        %1123 = vst [vmem:[#allocation3 + $0x10] sm:$0xff] %v1107
        %1124 = vst [vmem:[#allocation3 + $0x18] sm:$0xff] %v1108
        %1125 = vst [vmem:[#allocation3 + $0x20] sm:$0xff] %v1109
        %1126 = vst [vmem:[#allocation3 + $0x28] sm:$0xff] %v1110
        %1127 = vst [vmem:[#allocation3 + $0x30] sm:$0xff] %v1111
        %1128 = vst [vmem:[#allocation3 + $0x38] sm:$0xff] %v1112
        %1129 = vst [vmem:[#allocation3 + $0x40] sm:$0xff] %v1113
        %1130 = vst [vmem:[#allocation3 + $0x48] sm:$0xff] %v1114
        %1131 = vst [vmem:[#allocation3 + $0x50] sm:$0xff] %v1115
        %1132 = vst [vmem:[#allocation3 + $0x58] sm:$0xff] %v1116
        %1133 = vst [vmem:[#allocation3 + $0x60] sm:$0xff] %v1117
        %1134 = vst [vmem:[#allocation3 + $0x68] sm:$0xff] %v1118
        %1135 = vst [vmem:[#allocation3 + $0x70] sm:$0xff] %v1119
        %1136 = vst [vmem:[#allocation3 + $0x78] sm:$0xff] %v1120
        // Predicated region
        $region49: #{tpu_custom_call.1} parent=35 // pred_check
          %p1137 = pneg %p316
        $region50: #{tpu_custom_call.1} parent=35 // pred_check_branch
          %1139 = sbr.rel (%p1137) target = $region52
        $region51: #{tpu_custom_call.1} parent=35 // pred_region
          %v1140 = vld [vmem:[#allocation2] sm:$0xff]
          %v1141 = vld [vmem:[#allocation2 + $0x8] sm:$0xff]
          %v1142 = vld [vmem:[#allocation2 + $0x10] sm:$0xff]
          %v1143 = vld [vmem:[#allocation2 + $0x18] sm:$0xff]
          %v1144 = vld [vmem:[#allocation2 + $0x20] sm:$0xff]
          %v1145 = vld [vmem:[#allocation2 + $0x28] sm:$0xff]
          %v1146 = vld [vmem:[#allocation2 + $0x30] sm:$0xff]
          %v1147 = vld [vmem:[#allocation2 + $0x38] sm:$0xff]
          %v1148 = vld [vmem:[#allocation2 + $0x40] sm:$0xff]
          %v1149 = vld [vmem:[#allocation2 + $0x48] sm:$0xff]
          %v1150 = vld [vmem:[#allocation2 + $0x50] sm:$0xff]
          %v1151 = vld [vmem:[#allocation2 + $0x58] sm:$0xff]
          %v1152 = vld [vmem:[#allocation2 + $0x60] sm:$0xff]
          %v1153 = vld [vmem:[#allocation2 + $0x68] sm:$0xff]
          %v1154 = vld [vmem:[#allocation2 + $0x70] sm:$0xff]
          %v1155 = vld [vmem:[#allocation2 + $0x78] sm:$0xff]
          %v1156 = vld [vmem:[#allocation3] sm:$0xff]
          %v1157 = vld [vmem:[#allocation3 + $0x8] sm:$0xff]
          %v1158 = vld [vmem:[#allocation3 + $0x10] sm:$0xff]
          %v1159 = vld [vmem:[#allocation3 + $0x18] sm:$0xff]
          %v1160 = vld [vmem:[#allocation3 + $0x20] sm:$0xff]
          %v1161 = vld [vmem:[#allocation3 + $0x28] sm:$0xff]
          %v1162 = vld [vmem:[#allocation3 + $0x30] sm:$0xff]
          %v1163 = vld [vmem:[#allocation3 + $0x38] sm:$0xff]
          %v1164 = vld [vmem:[#allocation3 + $0x40] sm:$0xff]
          %v1165 = vld [vmem:[#allocation3 + $0x48] sm:$0xff]
          %v1166 = vld [vmem:[#allocation3 + $0x50] sm:$0xff]
          %v1167 = vld [vmem:[#allocation3 + $0x58] sm:$0xff]
          %v1168 = vld [vmem:[#allocation3 + $0x60] sm:$0xff]
          %v1169 = vld [vmem:[#allocation3 + $0x68] sm:$0xff]
          %v1170 = vld [vmem:[#allocation3 + $0x70] sm:$0xff]
          %v1171 = vld [vmem:[#allocation3 + $0x78] sm:$0xff]
          %v1172 = vmul.f32 %v1156, 5.656854
          %v1173 = vmul.f32 %v1157, 5.656854
          %v1174 = vmul.f32 %v1158, 5.656854
          %v1175 = vmul.f32 %v1159, 5.656854
          %v1176 = vmul.f32 %v1160, 5.656854
          %v1177 = vmul.f32 %v1161, 5.656854
          %v1178 = vmul.f32 %v1162, 5.656854
          %v1179 = vmul.f32 %v1163, 5.656854
          %v1180 = vmul.f32 %v1164, 5.656854
          %v1181 = vmul.f32 %v1165, 5.656854
          %v1182 = vmul.f32 %v1166, 5.656854
          %v1183 = vmul.f32 %v1167, 5.656854
          %v1184 = vmul.f32 %v1168, 5.656854
          %v1185 = vmul.f32 %v1169, 5.656854
          %v1186 = vmul.f32 %v1170, 5.656854
          %v1187 = vmul.f32 %v1171, 5.656854
          %v1188 = vmul.f32 %v1140, 0.5
          %v1189 = vmul.f32 %v1141, 0.5
          %v1190 = vmul.f32 %v1142, 0.5
          %v1191 = vmul.f32 %v1143, 0.5
          %v1192 = vmul.f32 %v1144, 0.5
          %v1193 = vmul.f32 %v1145, 0.5
          %v1194 = vmul.f32 %v1146, 0.5
          %v1195 = vmul.f32 %v1147, 0.5
          %v1196 = vmul.f32 %v1148, 0.5
          %v1197 = vmul.f32 %v1149, 0.5
          %v1198 = vmul.f32 %v1150, 0.5
          %v1199 = vmul.f32 %v1151, 0.5
          %v1200 = vmul.f32 %v1152, 0.5
          %v1201 = vmul.f32 %v1153, 0.5
          %v1202 = vmul.f32 %v1154, 0.5
          %v1203 = vmul.f32 %v1155, 0.5
          %v1204 = vmul.f32 %v1172, 0.5
          %v1205 = vmul.f32 %v1173, 0.5
          %v1206 = vmul.f32 %v1174, 0.5
          %v1207 = vmul.f32 %v1175, 0.5
          %v1208 = vmul.f32 %v1176, 0.5
          %v1209 = vmul.f32 %v1177, 0.5
          %v1210 = vmul.f32 %v1178, 0.5
          %v1211 = vmul.f32 %v1179, 0.5
          %v1212 = vmul.f32 %v1180, 0.5
          %v1213 = vmul.f32 %v1181, 0.5
          %v1214 = vmul.f32 %v1182, 0.5
          %v1215 = vmul.f32 %v1183, 0.5
          %v1216 = vmul.f32 %v1184, 0.5
          %v1217 = vmul.f32 %v1185, 0.5
          %v1218 = vmul.f32 %v1186, 0.5
          %v1219 = vmul.f32 %v1187, 0.5
          %v1220 = vadd.f32 %v1188, %v1204
          %v1221 = vadd.f32 %v1189, %v1205
          %v1222 = vadd.f32 %v1190, %v1206
          %v1223 = vadd.f32 %v1191, %v1207
          %v1224 = vadd.f32 %v1192, %v1208
          %v1225 = vadd.f32 %v1193, %v1209
          %v1226 = vadd.f32 %v1194, %v1210
          %v1227 = vadd.f32 %v1195, %v1211
          %v1228 = vadd.f32 %v1196, %v1212
          %v1229 = vadd.f32 %v1197, %v1213
          %v1230 = vadd.f32 %v1198, %v1214
          %v1231 = vadd.f32 %v1199, %v1215
          %v1232 = vadd.f32 %v1200, %v1216
          %v1233 = vadd.f32 %v1201, %v1217
          %v1234 = vadd.f32 %v1202, %v1218
          %v1235 = vadd.f32 %v1203, %v1219
          %1236 = vst [vmem:[%s311] sm:$0xff] %v1220
          %1237 = vst [vmem:[%s311 + $0x8] sm:$0xff] %v1221
          %1238 = vst [vmem:[%s311 + $0x10] sm:$0xff] %v1222
          %1239 = vst [vmem:[%s311 + $0x18] sm:$0xff] %v1223
          %1240 = vst [vmem:[%s311 + $0x20] sm:$0xff] %v1224
          %1241 = vst [vmem:[%s311 + $0x28] sm:$0xff] %v1225
          %1242 = vst [vmem:[%s311 + $0x30] sm:$0xff] %v1226
          %1243 = vst [vmem:[%s311 + $0x38] sm:$0xff] %v1227
          %1244 = vst [vmem:[%s311 + $0x40] sm:$0xff] %v1228
          %1245 = vst [vmem:[%s311 + $0x48] sm:$0xff] %v1229
          %1246 = vst [vmem:[%s311 + $0x50] sm:$0xff] %v1230
          %1247 = vst [vmem:[%s311 + $0x58] sm:$0xff] %v1231
          %1248 = vst [vmem:[%s311 + $0x60] sm:$0xff] %v1232
          %1249 = vst [vmem:[%s311 + $0x68] sm:$0xff] %v1233
          %1250 = vst [vmem:[%s311 + $0x70] sm:$0xff] %v1234
          %1251 = vst [vmem:[%s311 + $0x78] sm:$0xff] %v1235
        $region52: #{tpu_custom_call.1} parent=35 // pred_fallthru
          _
        %s1252 = sand.u32 %s147, 1
        %s1253 = scalar_lea.sflag [#allocation6], %s1252
        %s1254 = sand.u32 %s147, 1
        %s1255 = smul.addr %s1254, 16
        %s1256 = scalar_lea.vmem [#allocation9], %s1255
        %s1257 = sand.u32 %s173, 1
        %s1258 = scalar_lea.sflag [#allocation11], %s1257
        %s1259 = sand.u32 %s173, 1
        %s1260 = smul.addr %s1259, 128
        %s1261 = scalar_lea.vmem [#allocation10], %s1260
        // Predicated region
        $region53: #{tpu_custom_call.1} parent=35 // pred_check
          %p1262 = pneg %p157
        $region54: #{tpu_custom_call.1} parent=35 // pred_check_branch
          %1264 = sbr.rel (%p1262) target = $region56
        $region55: #{tpu_custom_call.1} parent=35 // pred_region
          %s1265 = smul.u32 2, %s34
          %s1267 = ssub.s32 256, 256
          %1268 = vsyncadd %s1253, %s1267
          %s1269 = smul.addr %s33, 2
          %s1270 = sadd.s32 %s1265, %s1269
          %s1271 = smul.addr %s1270, 128
          %s1272 = scalar_lea.hbm %s4, %s1271
          %s1273 = sshll.u32 %s1256, 4
          %s1274 = int_to_ptr.vmem [resolvable:$true] %s1273
          %1279 = dma.vmem_to_hbm [thread:$0]  %s1274, 256, %s1272, %s1253, 128, 128, 8
        $region56: #{tpu_custom_call.1} parent=35 // pred_fallthru
          _
        // Predicated region
        $region57: #{tpu_custom_call.1} parent=35 // pred_check
          %p1280 = pneg %p183
        $region58: #{tpu_custom_call.1} parent=35 // pred_check_branch
          %1282 = sbr.rel (%p1280) target = $region60
        $region59: #{tpu_custom_call.1} parent=35 // pred_region
          %s1284 = ssub.s32 2048, 2048
          %1285 = vsyncadd %s1258, %s1284
          %s1286 = smul.addr %s33, 16
          %s1287 = smul.addr %s1286, 128
          %s1288 = scalar_lea.hbm %s5, %s1287
          %s1289 = sshll.u32 %s1261, 4
          %s1290 = int_to_ptr.vmem [resolvable:$true] %s1289
          %1295 = dma.vmem_to_hbm [thread:$0]  %s1290, 2048, %s1288, %s1258, 128, 128, 8
        $region60: #{tpu_custom_call.1} parent=35 // pred_fallthru
          _
      $region36: #{tpu_custom_call.1} parent=5 // pred_fallthru
        _
      %p1296 = scmp.le.s32.totalorder 2, %s24
      // Predicated region
      $region61: #{tpu_custom_call.1} parent=5 // pred_check
        %p1297 = pneg %p1296
      $region62: #{tpu_custom_call.1} parent=5 // pred_check_branch
        %1299 = sbr.rel (%p1297) target = $region64
      $region63: #{tpu_custom_call.1} parent=5 // pred_region
        %s1300 = ssub.s32 %s24, 2
        // Predicated region
        $region65: #{tpu_custom_call.1} parent=63 // pred_check
          %p1301 = pneg %p163
        $region66: #{tpu_custom_call.1} parent=63 // pred_check_branch
          %1303 = sbr.rel (%p1301) target = $region68
        $region67: #{tpu_custom_call.1} parent=63 // pred_region
          %s1304 = sand.u32 %s148, 1
          %s1305 = scalar_lea.sflag [#allocation6], %s1304
          %s1306 = sand.u32 %s148, 1
          %s1307 = smul.addr %s1306, 16
          %s1308 = scalar_lea.vmem [#allocation9], %s1307
          %1309 = dma.done %s1305, 256
        $region68: #{tpu_custom_call.1} parent=63 // pred_fallthru
          _
        // Predicated region
        $region69: #{tpu_custom_call.1} parent=63 // pred_check
          %p1310 = pneg %p189
        $region70: #{tpu_custom_call.1} parent=63 // pred_check_branch
          %1312 = sbr.rel (%p1310) target = $region72
        $region71: #{tpu_custom_call.1} parent=63 // pred_region
          %s1313 = sand.u32 %s174, 1
          %s1314 = scalar_lea.sflag [#allocation11], %s1313
          %s1315 = sand.u32 %s174, 1
          %s1316 = smul.addr %s1315, 128
          %s1317 = scalar_lea.vmem [#allocation10], %s1316
          %1318 = dma.done %s1314, 2048
        $region72: #{tpu_custom_call.1} parent=63 // pred_fallthru
          _
      $region64: #{tpu_custom_call.1} parent=5 // pred_fallthru
        _
    $region6: #{tpu_custom_call.1} parent=1 // loop_footer
      %s28 = sadd.s32 1, %s24
    $region7: #{tpu_custom_call.1} parent=1 // loop_footer_branch
      %23 = sbr.rel target = $region3
    $region8: #{tpu_custom_call.1} parent=1 // loop_exit
      _
    %1319 = vsyncpa [#allocation5], 1
    %s1320 = scalar_lea.sflag [#allocation5], 1
    %1321 = vsyncpa %s1320, 1
    %1322 = vsyncpa [#allocation8], 1
    %s1323 = scalar_lea.sflag [#allocation8], 1
    %1324 = vsyncpa %s1323, 1
    %1325 = vsyncpa [#allocation6], 1
    %s1326 = scalar_lea.sflag [#allocation6], 1
    %1327 = vsyncpa %s1326, 1
    %1328 = vsyncpa [#allocation11], 1
    %s1329 = scalar_lea.sflag [#allocation11], 1
    %1330 = vsyncpa %s1329, 1

</llo_original>
